<compile_context>
chip_gen: v7x
topology: tpu7x:2x2x1
jax: 0.10.0
libtpu: 0.0.40
codegen_flags: <defaults>
</compile_context>

<pallas_src>
import functools
import math

import jax
import jax.numpy as jnp
from jax import lax
from jax.experimental import pallas as pl
from jax.experimental.pallas import tpu as pltpu


def _round_up(x, m):
    return ((x + m - 1) // m) * m


# ---------------------------------------------------------------------------
# Pallas kernel: whole sequence in one invocation, everything VMEM-resident.
# ---------------------------------------------------------------------------
def drnn_kernel(T, Bp, H1p, H2p,
                x_ref,       # (T*Bp, I1)   time-major input slab
                wpre_ref,    # (I1, HC)     [Wih1_p | 0]
                bpre_ref,    # (1, HC)      [b1_p   | b2_p]
                wc_ref,      # (HC, HC)     [[Whh1_p, Wih2_p], [0, Whh2_p]]
                wout_ref,    # (HC, OP)     block-diag [Wl1_p ; Wl2_p], 128 lanes
                bout_ref,    # (1, OP)      [bl1 | bl2] lane-padded
                o_ref,       # (T*Bp, OP)   fused y|z output
                pre_sc,      # VMEM (T*Bp, HC) staged input projection
                hall_sc):    # VMEM (T*Bp, HC) [h1_all | h2_all]
    f32 = jnp.float32

    # ---- Hoisted batched projection:
    #      pre[:, :H1p] = x_t @ Wih1 + b1   (RNN1 input term, per step t)
    #      pre[:, H1p:] = b2                (RNN2 bias term)
    pre_sc[...] = (jnp.dot(x_ref[...], wpre_ref[...],
                           preferred_element_type=f32) + bpre_ref[...])

    wc = wc_ref[...]

    # ---- t = 0: no recurrent matmul (h1_{-1} = 0, h2_{-1} = 0).
    pre0 = pre_sc[0:Bp, :]
    h1_0 = jnp.tanh(pre0[:, :H1p])
    hall_sc[0:Bp, :H1p] = h1_0
    c0 = jnp.concatenate([h1_0, jnp.zeros((Bp, H2p), f32)], axis=1)

    # ---- Interleaved one-step-pipelined recurrence, ONE MXU op per step.
    #      carry c = [h1_{t-1} | h2_{t-2}]
    def step(t, c):
        off = pl.multiple_of(t * Bp, Bp)
        pre_t = pre_sc[pl.ds(off, Bp), :]
        # pre_t add kept adjacent to the dot (MRB accumulation on v7x).
        c_new = jnp.tanh(pre_t + jnp.dot(c, wc, preferred_element_type=f32))
        hall_sc[pl.ds(off, Bp), :H1p] = c_new[:, :H1p]          # h1_t
        off_prev = pl.multiple_of((t - 1) * Bp, Bp)
        hall_sc[pl.ds(off_prev, Bp), H1p:] = c_new[:, H1p:]     # h2_{t-1}
        return c_new

    c = lax.fori_loop(1, T, step, c0, unroll=True)

    # ---- Drain the one-step pipeline: h2_{T-1}.
    m = jnp.dot(c, wc, preferred_element_type=f32)
    h2_last = jnp.tanh(bpre_ref[:, H1p:] + m[:, H1p:])
    hall_sc[(T - 1) * Bp:T * Bp, H1p:] = h2_last

    # ---- Fused output linears: one block-diagonal matmul, one lane-dense store.
    o_ref[...] = (jnp.dot(hall_sc[...], wout_ref[...],
                          preferred_element_type=f32) + bout_ref[...])


def drnn_forward_pallas(x_tm, params):
    """x_tm: (T, B, I1) float32 (time-major embedded context windows)."""
    T, B, I1 = x_tm.shape
    H1 = params["whh1"].shape[0]
    H2 = params["whh2"].shape[0]
    O1 = params["wl1"].shape[1]
    O2 = params["wl2"].shape[1]

    SUB, LANE = 8, 128
    Bp = _round_up(B, SUB)            # pad batch to sublane multiple
    H1p = _round_up(H1, LANE)         # pad hidden to full lanes
    H2p = _round_up(H2, LANE)
    HC = H1p + H2p
    OP = _round_up(O1 + O2, LANE)     # fused, lane-padded output width

    f32 = jnp.float32

    # Pad batch and flatten time-major into a (T*Bp, I1) slab.
    xp = jnp.pad(x_tm, ((0, 0), (0, Bp - B), (0, 0))).reshape(T * Bp, I1)

    # Fused / padded weights (built once; zero padding is exact).
    wpre = jnp.zeros((I1, HC), f32).at[:, :H1].set(params["wih1"])
    bpre = (jnp.zeros((1, HC), f32)
            .at[:, :H1].set(params["b1"])
            .at[:, H1p:H1p + H2].set(params["b2"]))
    wc = (jnp.zeros((HC, HC), f32)
          .at[:H1, :H1].set(params["whh1"])
          .at[:H1, H1p:H1p + H2].set(params["wih2"])
          .at[H1p:H1p + H2, H1p:H1p + H2].set(params["whh2"]))
    wout = (jnp.zeros((HC, OP), f32)
            .at[:H1, :O1].set(params["wl1"])
            .at[H1p:H1p + H2, O1:O1 + O2].set(params["wl2"]))
    bout = (jnp.zeros((1, OP), f32)
            .at[:, :O1].set(params["bl1"])
            .at[:, O1:O1 + O2].set(params["bl2"]))

    kernel = functools.partial(drnn_kernel, T, Bp, H1p, H2p)
    full = lambda a: pl.BlockSpec(a.shape, lambda i: (0, 0))   # whole-array block

    out_pad = pl.pallas_call(
        kernel,
        out_shape=jax.ShapeDtypeStruct((T * Bp, OP), f32),
        grid_spec=pltpu.PrefetchScalarGridSpec(
            num_scalar_prefetch=0,
            grid=(1,),                    # single invocation: all VMEM-resident
            in_specs=[full(xp), full(wpre), full(bpre),
                      full(wc), full(wout), full(bout)],
            out_specs=pl.BlockSpec((T * Bp, OP), lambda i: (0, 0)),
            scratch_shapes=[
                pltpu.VMEM((T * Bp, HC), f32),   # staged input projection
                pltpu.VMEM((T * Bp, HC), f32),   # [h1_all | h2_all]
            ],
        ),
        # TODO(synk): for large T*B on v7x (64 MiB VMEM) switch to a T-blocked
        # grid with a carried hidden state and a batch-parallel leading axis.
        compiler_params=pltpu.CompilerParams(
            dimension_semantics=("arbitrary",)),
    )(xp, wpre, bpre, wc, wout, bout)

    # Un-pad, split fused output, return batch-first.
    out = out_pad.reshape(T, Bp, OP)[:, :B, :]
    y = jnp.swapaxes(out[..., :O1], 0, 1)
    z = jnp.swapaxes(out[..., O1:O1 + O2], 0, 1)
    return y, z


# ---------------------------------------------------------------------------
# Glue (plain JAX): context windows, embedding lookup, parameter setup.
# ---------------------------------------------------------------------------
def context_windows(idx, win=3):
    """idx: (B, T) int32 -> (B, T, win), zero-padded, matching contextwin_2."""
    assert win % 2 == 1
    pad = win // 2
    padded = jnp.pad(idx, ((0, 0), (pad, pad)))
    T = idx.shape[1]
    return jnp.stack([padded[:, i:i + T] for i in range(win)], axis=-1)


def drnn_no_embw_forward(idx, params):
    # embedding + flatten(2); dropout is identity in eval mode
    # TODO(synk): at realistic vec_size, fuse this gather into the kernel via
    # scalar-prefetched token ids + pl.Element index_maps (removes one HBM
    # round trip of the (B,T,3V) slab). Negligible at toy size.
    win = context_windows(idx, 3)                       # (B, T, 3)
    emb = jnp.take(params["embw"], win, axis=0)         # (B, T, 3, V)
    B, T = idx.shape
    x = emb.reshape(B, T, -1).astype(jnp.float32)       # (B, T, 3*V)
    # TODO(synk): training-mode dropout (p=0.5) not modeled; eval = identity.
    x_tm = jnp.swapaxes(x, 0, 1)                        # (T, B, I1)
    return drnn_forward_pallas(x_tm, params)


def drnn_reference(idx, params):
    """Pure-JAX reference of the same forward (for validation)."""
    win = context_windows(idx, 3)
    emb = jnp.take(params["embw"], win, axis=0)
    B, T = idx.shape
    x = emb.reshape(B, T, -1).astype(jnp.float32)

    def run_rnn(xseq, wih, whh, b):
        def step(h, xt):
            h = jnp.tanh(xt @ wih + h @ whh + b)
            return h, h
        h0 = jnp.zeros((xseq.shape[1], whh.shape[0]), jnp.float32)
        _, hs = jax.lax.scan(step, h0, xseq)
        return hs

    x_tm = jnp.swapaxes(x, 0, 1)
    h1 = run_rnn(x_tm, params["wih1"], params["whh1"], params["b1"][0])
    h2 = run_rnn(h1, params["wih2"], params["whh2"], params["b2"][0])
    y = h1 @ params["wl1"] + params["bl1"][0]
    z = h2 @ params["wl2"] + params["bl2"][0]
    return jnp.swapaxes(y, 0, 1), jnp.swapaxes(z, 0, 1)


def init_params(key, embw_size, vec_size, H1, H2, O1, O2):
    I1 = 3 * vec_size
    ks = jax.random.split(key, 14)
    u = lambda k, shape, bound: jax.random.uniform(
        k, shape, jnp.float32, minval=-bound, maxval=bound)
    xavier = lambda k, fi, fo: jax.random.normal(k, (fi, fo), jnp.float32) * \
        math.sqrt(2.0 / (fi + fo))

    k1 = 1.0 / math.sqrt(H1)
    k2 = 1.0 / math.sqrt(H2)
    return {
        "embw": jax.random.normal(ks[0], (embw_size, vec_size), jnp.float32),
        # RNN weights stored as [in, out] so the kernel computes x @ W.
        "wih1": u(ks[1], (I1, H1), k1),
        "whh1": u(ks[2], (H1, H1), k1),
        "b1":   u(ks[3], (1, H1), k1) + u(ks[4], (1, H1), k1),  # b_ih + b_hh
        "wih2": u(ks[5], (H1, H2), k2),
        "whh2": u(ks[6], (H2, H2), k2),
        "b2":   u(ks[7], (1, H2), k2) + u(ks[8], (1, H2), k2),
        # Linear layers: xavier_normal_ weights (per weight_init), default bias.
        "wl1":  xavier(ks[9], H1, O1),
        "bl1":  u(ks[10], (1, O1), 1.0 / math.sqrt(H1)),
        "wl2":  xavier(ks[11], H2, O2),
        "bl2":  u(ks[12], (1, O2), 1.0 / math.sqrt(H2)),
    }


if __name__ == "__main__":
    # Module hyper-parameters (inputsize == hiddensize1 == inchanle == hiddensize2
    # is required by the original forward's wiring).
    B, T = 4, 8
    embw_size, vec_size = 16, 8
    H1 = H2 = 32          # hiddensize1 / hiddensize2 / inchanle / inputsize
    O1, O2 = 8, 16        # outchanle1 / outchanle2

    key = jax.random.PRNGKey(0)
    pkey, ikey = jax.random.split(key)
    params = init_params(pkey, embw_size, vec_size, H1, H2, O1, O2)

    idx = jax.random.randint(ikey, (B, T), 0, embw_size, dtype=jnp.int32)

    y, z = drnn_no_embw_forward(idx, params)
    y = jax.block_until_ready(y)
    z = jax.block_until_ready(z)

    # Validate against pure-JAX reference.
    y_ref, z_ref = drnn_reference(idx, params)
    assert y.shape == (B, T, O1) and z.shape == (B, T, O2)
    assert jnp.allclose(y, y_ref, atol=1e-4, rtol=1e-4)
    assert jnp.allclose(z, z_ref, atol=1e-4, rtol=1e-4)

    print("KERNEL_OK")
</pallas_src>

<mosaic_0001>
module attributes {stable_mosaic.version = 11 : i64} {
  func.func @drnn_kernel(%arg0: i32, %arg1: memref<64x24xf32, #tpu.memory_space<vmem>>, %arg2: memref<24x256xf32, #tpu.memory_space<vmem>>, %arg3: memref<1x256xf32, #tpu.memory_space<vmem>>, %arg4: memref<256x256xf32, #tpu.memory_space<vmem>>, %arg5: memref<256x128xf32, #tpu.memory_space<vmem>>, %arg6: memref<1x128xf32, #tpu.memory_space<vmem>>, %arg7: memref<64x128xf32, #tpu.memory_space<vmem>>, %arg8: memref<64x256xf32, #tpu.memory_space<vmem>>, %arg9: memref<64x256xf32, #tpu.memory_space<vmem>>) attributes {dimension_semantics = [#tpu.dimension_semantics<arbitrary>], iteration_bounds = array<i64: 1>, scalar_prefetch = 0 : i64, scratch_operands = 2 : i64, tpu.core_type = #tpu.core_type<tc>, window_params = [{pipeline_mode = #tpu.pipeline_mode<synchronous>, transform_indices = @transform_0, window_bounds = array<i64: 64, 24>}, {pipeline_mode = #tpu.pipeline_mode<synchronous>, transform_indices = @transform_1, window_bounds = array<i64: 24, 256>}, {pipeline_mode = #tpu.pipeline_mode<synchronous>, transform_indices = @transform_2, window_bounds = array<i64: 1, 256>}, {pipeline_mode = #tpu.pipeline_mode<synchronous>, transform_indices = @transform_3, window_bounds = array<i64: 256, 256>}, {pipeline_mode = #tpu.pipeline_mode<synchronous>, transform_indices = @transform_4, window_bounds = array<i64: 256, 128>}, {pipeline_mode = #tpu.pipeline_mode<synchronous>, transform_indices = @transform_5, window_bounds = array<i64: 1, 128>}, {pipeline_mode = #tpu.pipeline_mode<synchronous>, transform_indices = @transform_6, window_bounds = array<i64: 64, 128>}]} {
    %c0 = arith.constant 0 : index
    %c0_0 = arith.constant 0 : index
    %0 = vector.load %arg1[%c0, %c0_0] : memref<64x24xf32, #tpu.memory_space<vmem>>, vector<64x24xf32>
    %c0_1 = arith.constant 0 : index
    %c0_2 = arith.constant 0 : index
    %1 = vector.load %arg2[%c0_1, %c0_2] : memref<24x256xf32, #tpu.memory_space<vmem>>, vector<24x256xf32>
    %cst = arith.constant dense<0.000000e+00> : vector<64x256xf32>
    %2 = tpu.matmul %0, %1, %cst {dimension_numbers = #tpu.dot_dimension_numbers<[1], [0], [0], [1], [0, 0, 1, 1], [], []>} : vector<64x24xf32>, vector<24x256xf32>, vector<64x256xf32> -> vector<64x256xf32>
    %c0_3 = arith.constant 0 : index
    %c0_4 = arith.constant 0 : index
    %3 = vector.load %arg3[%c0_3, %c0_4] : memref<1x256xf32, #tpu.memory_space<vmem>>, vector<1x256xf32>
    %4 = vector.broadcast %3 : vector<1x256xf32> to vector<64x256xf32>
    %5 = arith.addf %2, %4 : vector<64x256xf32>
    %c0_5 = arith.constant 0 : index
    %c0_6 = arith.constant 0 : index
    %6 = vector.load %arg8[%c0_5, %c0_6] : memref<64x256xf32, #tpu.memory_space<vmem>>, vector<64x256xf32>
    tpu.vector_store %arg8[%c0_5, %c0_6], %5 {strides = array<i32>} : memref<64x256xf32, #tpu.memory_space<vmem>>, vector<64x256xf32>,
    %c0_7 = arith.constant 0 : index
    %c0_8 = arith.constant 0 : index
    %7 = vector.load %arg4[%c0_7, %c0_8] : memref<256x256xf32, #tpu.memory_space<vmem>>, vector<256x256xf32>
    %c0_9 = arith.constant 0 : index
    %c0_10 = arith.constant 0 : index
    %8 = vector.load %arg8[%c0_9, %c0_10] : memref<64x256xf32, #tpu.memory_space<vmem>>, vector<8x256xf32>
    %9 = vector.extract_strided_slice %8 {offsets = [0, 0], sizes = [8, 128], strides = [1, 1]} : vector<8x256xf32> to vector<8x128xf32>
    %10 = math.tanh %9 : vector<8x128xf32>
    %c0_11 = arith.constant 0 : index
    %c0_12 = arith.constant 0 : index
    %11 = vector.load %arg9[%c0_11, %c0_12] : memref<64x256xf32, #tpu.memory_space<vmem>>, vector<8x128xf32>
    tpu.vector_store %arg9[%c0_11, %c0_12], %10 {strides = array<i32>} : memref<64x256xf32, #tpu.memory_space<vmem>>, vector<8x128xf32>,
    %cst_13 = arith.constant 0.000000e+00 : f32
    %12 = vector.broadcast %cst_13 : f32 to vector<8x128xf32>
    %13 = tpu.concatenate %10, %12 in 1 : vector<8x128xf32>, vector<8x128xf32> -> vector<8x256xf32>
    %c1_i32 = arith.constant 1 : i32
    %c8_i32 = arith.constant 8 : i32
    %14 = arith.muli %c1_i32, %c8_i32 : i32
    %15 = tpu.assume_multiple %14, 8 : i32
    %16 = arith.index_cast %15 : i32 to index
    %c0_14 = arith.constant 0 : index
    %17 = vector.load %arg8[%16, %c0_14] : memref<64x256xf32, #tpu.memory_space<vmem>>, vector<8x256xf32>
    %cst_15 = arith.constant dense<0.000000e+00> : vector<8x256xf32>
    %18 = tpu.matmul %13, %7, %cst_15 {dimension_numbers = #tpu.dot_dimension_numbers<[1], [0], [0], [1], [0, 0, 1, 1], [], []>} : vector<8x256xf32>, vector<256x256xf32>, vector<8x256xf32> -> vector<8x256xf32>
    %19 = arith.addf %17, %18 : vector<8x256xf32>
    %20 = math.tanh %19 : vector<8x256xf32>
    %21 = vector.extract_strided_slice %20 {offsets = [0, 0], sizes = [8, 128], strides = [1, 1]} : vector<8x256xf32> to vector<8x128xf32>
    %22 = arith.index_cast %15 : i32 to index
    %c0_16 = arith.constant 0 : index
    %23 = vector.load %arg9[%22, %c0_16] : memref<64x256xf32, #tpu.memory_space<vmem>>, vector<8x128xf32>
    tpu.vector_store %arg9[%22, %c0_16], %21 {strides = array<i32>} : memref<64x256xf32, #tpu.memory_space<vmem>>, vector<8x128xf32>,
    %c1_i32_17 = arith.constant 1 : i32
    %24 = arith.subi %c1_i32, %c1_i32_17 : i32
    %c8_i32_18 = arith.constant 8 : i32
    %25 = arith.muli %24, %c8_i32_18 : i32
    %26 = tpu.assume_multiple %25, 8 : i32
    %27 = vector.extract_strided_slice %20 {offsets = [0, 128], sizes = [8, 128], strides = [1, 1]} : vector<8x256xf32> to vector<8x128xf32>
    %28 = arith.index_cast %26 : i32 to index
    %c128 = arith.constant 128 : index
    %29 = vector.load %arg9[%28, %c128] : memref<64x256xf32, #tpu.memory_space<vmem>>, vector<8x128xf32>
    tpu.vector_store %arg9[%28, %c128], %27 {strides = array<i32>} : memref<64x256xf32, #tpu.memory_space<vmem>>, vector<8x128xf32>,
    %c2_i32 = arith.constant 2 : i32
    %c8_i32_19 = arith.constant 8 : i32
    %30 = arith.muli %c2_i32, %c8_i32_19 : i32
    %31 = tpu.assume_multiple %30, 8 : i32
    %32 = arith.index_cast %31 : i32 to index
    %c0_20 = arith.constant 0 : index
    %33 = vector.load %arg8[%32, %c0_20] : memref<64x256xf32, #tpu.memory_space<vmem>>, vector<8x256xf32>
    %cst_21 = arith.constant dense<0.000000e+00> : vector<8x256xf32>
    %34 = tpu.matmul %20, %7, %cst_21 {dimension_numbers = #tpu.dot_dimension_numbers<[1], [0], [0], [1], [0, 0, 1, 1], [], []>} : vector<8x256xf32>, vector<256x256xf32>, vector<8x256xf32> -> vector<8x256xf32>
    %35 = arith.addf %33, %34 : vector<8x256xf32>
    %36 = math.tanh %35 : vector<8x256xf32>
    %37 = vector.extract_strided_slice %36 {offsets = [0, 0], sizes = [8, 128], strides = [1, 1]} : vector<8x256xf32> to vector<8x128xf32>
    %38 = arith.index_cast %31 : i32 to index
    %c0_22 = arith.constant 0 : index
    %39 = vector.load %arg9[%38, %c0_22] : memref<64x256xf32, #tpu.memory_space<vmem>>, vector<8x128xf32>
    tpu.vector_store %arg9[%38, %c0_22], %37 {strides = array<i32>} : memref<64x256xf32, #tpu.memory_space<vmem>>, vector<8x128xf32>,
    %c1_i32_23 = arith.constant 1 : i32
    %40 = arith.subi %c2_i32, %c1_i32_23 : i32
    %c8_i32_24 = arith.constant 8 : i32
    %41 = arith.muli %40, %c8_i32_24 : i32
    %42 = tpu.assume_multiple %41, 8 : i32
    %43 = vector.extract_strided_slice %36 {offsets = [0, 128], sizes = [8, 128], strides = [1, 1]} : vector<8x256xf32> to vector<8x128xf32>
    %44 = arith.index_cast %42 : i32 to index
    %c128_25 = arith.constant 128 : index
    %45 = vector.load %arg9[%44, %c128_25] : memref<64x256xf32, #tpu.memory_space<vmem>>, vector<8x128xf32>
    tpu.vector_store %arg9[%44, %c128_25], %43 {strides = array<i32>} : memref<64x256xf32, #tpu.memory_space<vmem>>, vector<8x128xf32>,
    %c3_i32 = arith.constant 3 : i32
    %c8_i32_26 = arith.constant 8 : i32
    %46 = arith.muli %c3_i32, %c8_i32_26 : i32
    %47 = tpu.assume_multiple %46, 8 : i32
    %48 = arith.index_cast %47 : i32 to index
    %c0_27 = arith.constant 0 : index
    %49 = vector.load %arg8[%48, %c0_27] : memref<64x256xf32, #tpu.memory_space<vmem>>, vector<8x256xf32>
    %cst_28 = arith.constant dense<0.000000e+00> : vector<8x256xf32>
    %50 = tpu.matmul %36, %7, %cst_28 {dimension_numbers = #tpu.dot_dimension_numbers<[1], [0], [0], [1], [0, 0, 1, 1], [], []>} : vector<8x256xf32>, vector<256x256xf32>, vector<8x256xf32> -> vector<8x256xf32>
    %51 = arith.addf %49, %50 : vector<8x256xf32>
    %52 = math.tanh %51 : vector<8x256xf32>
    %53 = vector.extract_strided_slice %52 {offsets = [0, 0], sizes = [8, 128], strides = [1, 1]} : vector<8x256xf32> to vector<8x128xf32>
    %54 = arith.index_cast %47 : i32 to index
    %c0_29 = arith.constant 0 : index
    %55 = vector.load %arg9[%54, %c0_29] : memref<64x256xf32, #tpu.memory_space<vmem>>, vector<8x128xf32>
    tpu.vector_store %arg9[%54, %c0_29], %53 {strides = array<i32>} : memref<64x256xf32, #tpu.memory_space<vmem>>, vector<8x128xf32>,
    %c1_i32_30 = arith.constant 1 : i32
    %56 = arith.subi %c3_i32, %c1_i32_30 : i32
    %c8_i32_31 = arith.constant 8 : i32
    %57 = arith.muli %56, %c8_i32_31 : i32
    %58 = tpu.assume_multiple %57, 8 : i32
    %59 = vector.extract_strided_slice %52 {offsets = [0, 128], sizes = [8, 128], strides = [1, 1]} : vector<8x256xf32> to vector<8x128xf32>
    %60 = arith.index_cast %58 : i32 to index
    %c128_32 = arith.constant 128 : index
    %61 = vector.load %arg9[%60, %c128_32] : memref<64x256xf32, #tpu.memory_space<vmem>>, vector<8x128xf32>
    tpu.vector_store %arg9[%60, %c128_32], %59 {strides = array<i32>} : memref<64x256xf32, #tpu.memory_space<vmem>>, vector<8x128xf32>,
    %c4_i32 = arith.constant 4 : i32
    %c8_i32_33 = arith.constant 8 : i32
    %62 = arith.muli %c4_i32, %c8_i32_33 : i32
    %63 = tpu.assume_multiple %62, 8 : i32
    %64 = arith.index_cast %63 : i32 to index
    %c0_34 = arith.constant 0 : index
    %65 = vector.load %arg8[%64, %c0_34] : memref<64x256xf32, #tpu.memory_space<vmem>>, vector<8x256xf32>
    %cst_35 = arith.constant dense<0.000000e+00> : vector<8x256xf32>
    %66 = tpu.matmul %52, %7, %cst_35 {dimension_numbers = #tpu.dot_dimension_numbers<[1], [0], [0], [1], [0, 0, 1, 1], [], []>} : vector<8x256xf32>, vector<256x256xf32>, vector<8x256xf32> -> vector<8x256xf32>
    %67 = arith.addf %65, %66 : vector<8x256xf32>
    %68 = math.tanh %67 : vector<8x256xf32>
    %69 = vector.extract_strided_slice %68 {offsets = [0, 0], sizes = [8, 128], strides = [1, 1]} : vector<8x256xf32> to vector<8x128xf32>
    %70 = arith.index_cast %63 : i32 to index
    %c0_36 = arith.constant 0 : index
    %71 = vector.load %arg9[%70, %c0_36] : memref<64x256xf32, #tpu.memory_space<vmem>>, vector<8x128xf32>
    tpu.vector_store %arg9[%70, %c0_36], %69 {strides = array<i32>} : memref<64x256xf32, #tpu.memory_space<vmem>>, vector<8x128xf32>,
    %c1_i32_37 = arith.constant 1 : i32
    %72 = arith.subi %c4_i32, %c1_i32_37 : i32
    %c8_i32_38 = arith.constant 8 : i32
    %73 = arith.muli %72, %c8_i32_38 : i32
    %74 = tpu.assume_multiple %73, 8 : i32
    %75 = vector.extract_strided_slice %68 {offsets = [0, 128], sizes = [8, 128], strides = [1, 1]} : vector<8x256xf32> to vector<8x128xf32>
    %76 = arith.index_cast %74 : i32 to index
    %c128_39 = arith.constant 128 : index
    %77 = vector.load %arg9[%76, %c128_39] : memref<64x256xf32, #tpu.memory_space<vmem>>, vector<8x128xf32>
    tpu.vector_store %arg9[%76, %c128_39], %75 {strides = array<i32>} : memref<64x256xf32, #tpu.memory_space<vmem>>, vector<8x128xf32>,
    %c5_i32 = arith.constant 5 : i32
    %c8_i32_40 = arith.constant 8 : i32
    %78 = arith.muli %c5_i32, %c8_i32_40 : i32
    %79 = tpu.assume_multiple %78, 8 : i32
    %80 = arith.index_cast %79 : i32 to index
    %c0_41 = arith.constant 0 : index
    %81 = vector.load %arg8[%80, %c0_41] : memref<64x256xf32, #tpu.memory_space<vmem>>, vector<8x256xf32>
    %cst_42 = arith.constant dense<0.000000e+00> : vector<8x256xf32>
    %82 = tpu.matmul %68, %7, %cst_42 {dimension_numbers = #tpu.dot_dimension_numbers<[1], [0], [0], [1], [0, 0, 1, 1], [], []>} : vector<8x256xf32>, vector<256x256xf32>, vector<8x256xf32> -> vector<8x256xf32>
    %83 = arith.addf %81, %82 : vector<8x256xf32>
    %84 = math.tanh %83 : vector<8x256xf32>
    %85 = vector.extract_strided_slice %84 {offsets = [0, 0], sizes = [8, 128], strides = [1, 1]} : vector<8x256xf32> to vector<8x128xf32>
    %86 = arith.index_cast %79 : i32 to index
    %c0_43 = arith.constant 0 : index
    %87 = vector.load %arg9[%86, %c0_43] : memref<64x256xf32, #tpu.memory_space<vmem>>, vector<8x128xf32>
    tpu.vector_store %arg9[%86, %c0_43], %85 {strides = array<i32>} : memref<64x256xf32, #tpu.memory_space<vmem>>, vector<8x128xf32>,
    %c1_i32_44 = arith.constant 1 : i32
    %88 = arith.subi %c5_i32, %c1_i32_44 : i32
    %c8_i32_45 = arith.constant 8 : i32
    %89 = arith.muli %88, %c8_i32_45 : i32
    %90 = tpu.assume_multiple %89, 8 : i32
    %91 = vector.extract_strided_slice %84 {offsets = [0, 128], sizes = [8, 128], strides = [1, 1]} : vector<8x256xf32> to vector<8x128xf32>
    %92 = arith.index_cast %90 : i32 to index
    %c128_46 = arith.constant 128 : index
    %93 = vector.load %arg9[%92, %c128_46] : memref<64x256xf32, #tpu.memory_space<vmem>>, vector<8x128xf32>
    tpu.vector_store %arg9[%92, %c128_46], %91 {strides = array<i32>} : memref<64x256xf32, #tpu.memory_space<vmem>>, vector<8x128xf32>,
    %c6_i32 = arith.constant 6 : i32
    %c8_i32_47 = arith.constant 8 : i32
    %94 = arith.muli %c6_i32, %c8_i32_47 : i32
    %95 = tpu.assume_multiple %94, 8 : i32
    %96 = arith.index_cast %95 : i32 to index
    %c0_48 = arith.constant 0 : index
    %97 = vector.load %arg8[%96, %c0_48] : memref<64x256xf32, #tpu.memory_space<vmem>>, vector<8x256xf32>
    %cst_49 = arith.constant dense<0.000000e+00> : vector<8x256xf32>
    %98 = tpu.matmul %84, %7, %cst_49 {dimension_numbers = #tpu.dot_dimension_numbers<[1], [0], [0], [1], [0, 0, 1, 1], [], []>} : vector<8x256xf32>, vector<256x256xf32>, vector<8x256xf32> -> vector<8x256xf32>
    %99 = arith.addf %97, %98 : vector<8x256xf32>
    %100 = math.tanh %99 : vector<8x256xf32>
    %101 = vector.extract_strided_slice %100 {offsets = [0, 0], sizes = [8, 128], strides = [1, 1]} : vector<8x256xf32> to vector<8x128xf32>
    %102 = arith.index_cast %95 : i32 to index
    %c0_50 = arith.constant 0 : index
    %103 = vector.load %arg9[%102, %c0_50] : memref<64x256xf32, #tpu.memory_space<vmem>>, vector<8x128xf32>
    tpu.vector_store %arg9[%102, %c0_50], %101 {strides = array<i32>} : memref<64x256xf32, #tpu.memory_space<vmem>>, vector<8x128xf32>,
    %c1_i32_51 = arith.constant 1 : i32
    %104 = arith.subi %c6_i32, %c1_i32_51 : i32
    %c8_i32_52 = arith.constant 8 : i32
    %105 = arith.muli %104, %c8_i32_52 : i32
    %106 = tpu.assume_multiple %105, 8 : i32
    %107 = vector.extract_strided_slice %100 {offsets = [0, 128], sizes = [8, 128], strides = [1, 1]} : vector<8x256xf32> to vector<8x128xf32>
    %108 = arith.index_cast %106 : i32 to index
    %c128_53 = arith.constant 128 : index
    %109 = vector.load %arg9[%108, %c128_53] : memref<64x256xf32, #tpu.memory_space<vmem>>, vector<8x128xf32>
    tpu.vector_store %arg9[%108, %c128_53], %107 {strides = array<i32>} : memref<64x256xf32, #tpu.memory_space<vmem>>, vector<8x128xf32>,
    %c7_i32 = arith.constant 7 : i32
    %c8_i32_54 = arith.constant 8 : i32
    %110 = arith.muli %c7_i32, %c8_i32_54 : i32
    %111 = tpu.assume_multiple %110, 8 : i32
    %112 = arith.index_cast %111 : i32 to index
    %c0_55 = arith.constant 0 : index
    %113 = vector.load %arg8[%112, %c0_55] : memref<64x256xf32, #tpu.memory_space<vmem>>, vector<8x256xf32>
    %cst_56 = arith.constant dense<0.000000e+00> : vector<8x256xf32>
    %114 = tpu.matmul %100, %7, %cst_56 {dimension_numbers = #tpu.dot_dimension_numbers<[1], [0], [0], [1], [0, 0, 1, 1], [], []>} : vector<8x256xf32>, vector<256x256xf32>, vector<8x256xf32> -> vector<8x256xf32>
    %115 = arith.addf %113, %114 : vector<8x256xf32>
    %116 = math.tanh %115 : vector<8x256xf32>
    %117 = vector.extract_strided_slice %116 {offsets = [0, 0], sizes = [8, 128], strides = [1, 1]} : vector<8x256xf32> to vector<8x128xf32>
    %118 = arith.index_cast %111 : i32 to index
    %c0_57 = arith.constant 0 : index
    %119 = vector.load %arg9[%118, %c0_57] : memref<64x256xf32, #tpu.memory_space<vmem>>, vector<8x128xf32>
    tpu.vector_store %arg9[%118, %c0_57], %117 {strides = array<i32>} : memref<64x256xf32, #tpu.memory_space<vmem>>, vector<8x128xf32>,
    %c1_i32_58 = arith.constant 1 : i32
    %120 = arith.subi %c7_i32, %c1_i32_58 : i32
    %c8_i32_59 = arith.constant 8 : i32
    %121 = arith.muli %120, %c8_i32_59 : i32
    %122 = tpu.assume_multiple %121, 8 : i32
    %123 = vector.extract_strided_slice %116 {offsets = [0, 128], sizes = [8, 128], strides = [1, 1]} : vector<8x256xf32> to vector<8x128xf32>
    %124 = arith.index_cast %122 : i32 to index
    %c128_60 = arith.constant 128 : index
    %125 = vector.load %arg9[%124, %c128_60] : memref<64x256xf32, #tpu.memory_space<vmem>>, vector<8x128xf32>
    tpu.vector_store %arg9[%124, %c128_60], %123 {strides = array<i32>} : memref<64x256xf32, #tpu.memory_space<vmem>>, vector<8x128xf32>,
    %c7_i32_61 = arith.constant 7 : i32
    %cst_62 = arith.constant dense<0.000000e+00> : vector<8x256xf32>
    %126 = tpu.matmul %116, %7, %cst_62 {dimension_numbers = #tpu.dot_dimension_numbers<[1], [0], [0], [1], [0, 0, 1, 1], [], []>} : vector<8x256xf32>, vector<256x256xf32>, vector<8x256xf32> -> vector<8x256xf32>
    %c0_63 = arith.constant 0 : index
    %c128_64 = arith.constant 128 : index
    %127 = vector.load %arg3[%c0_63, %c128_64] : memref<1x256xf32, #tpu.memory_space<vmem>>, vector<1x128xf32>
    %128 = vector.extract_strided_slice %126 {offsets = [0, 128], sizes = [8, 128], strides = [1, 1]} : vector<8x256xf32> to vector<8x128xf32>
    %129 = vector.broadcast %127 : vector<1x128xf32> to vector<8x128xf32>
    %130 = arith.addf %129, %128 : vector<8x128xf32>
    %131 = math.tanh %130 : vector<8x128xf32>
    %c56 = arith.constant 56 : index
    %c128_65 = arith.constant 128 : index
    %132 = vector.load %arg9[%c56, %c128_65] : memref<64x256xf32, #tpu.memory_space<vmem>>, vector<8x128xf32>
    tpu.vector_store %arg9[%c56, %c128_65], %131 {strides = array<i32>} : memref<64x256xf32, #tpu.memory_space<vmem>>, vector<8x128xf32>,
    %c0_66 = arith.constant 0 : index
    %c0_67 = arith.constant 0 : index
    %133 = vector.load %arg9[%c0_66, %c0_67] : memref<64x256xf32, #tpu.memory_space<vmem>>, vector<64x256xf32>
    %c0_68 = arith.constant 0 : index
    %c0_69 = arith.constant 0 : index
    %134 = vector.load %arg5[%c0_68, %c0_69] : memref<256x128xf32, #tpu.memory_space<vmem>>, vector<256x128xf32>
    %cst_70 = arith.constant dense<0.000000e+00> : vector<64x128xf32>
    %135 = tpu.matmul %133, %134, %cst_70 {dimension_numbers = #tpu.dot_dimension_numbers<[1], [0], [0], [1], [0, 0, 1, 1], [], []>} : vector<64x256xf32>, vector<256x128xf32>, vector<64x128xf32> -> vector<64x128xf32>
    %c0_71 = arith.constant 0 : index
    %c0_72 = arith.constant 0 : index
    %136 = vector.load %arg6[%c0_71, %c0_72] : memref<1x128xf32, #tpu.memory_space<vmem>>, vector<1x128xf32>
    %137 = vector.broadcast %136 : vector<1x128xf32> to vector<64x128xf32>
    %138 = arith.addf %135, %137 : vector<64x128xf32>
    %c0_73 = arith.constant 0 : index
    %c0_74 = arith.constant 0 : index
    %139 = vector.load %arg7[%c0_73, %c0_74] : memref<64x128xf32, #tpu.memory_space<vmem>>, vector<64x128xf32>
    tpu.vector_store %arg7[%c0_73, %c0_74], %138 {strides = array<i32>} : memref<64x128xf32, #tpu.memory_space<vmem>>, vector<64x128xf32>,
    return
  }
  func.func @transform_0(%arg0: i32) -> (i32, i32) {
    %c0_i32 = arith.constant 0 : i32
    %c0_i32_0 = arith.constant 0 : i32
    %c0_i32_1 = arith.constant 0 : i32
    return %c0_i32, %c0_i32_0 : i32, i32
  }
  func.func @transform_1(%arg0: i32) -> (i32, i32) {
    %c0_i32 = arith.constant 0 : i32
    %c0_i32_0 = arith.constant 0 : i32
    %c0_i32_1 = arith.constant 0 : i32
    return %c0_i32, %c0_i32_0 : i32, i32
  }
  func.func @transform_2(%arg0: i32) -> (i32, i32) {
    %c0_i32 = arith.constant 0 : i32
    %c0_i32_0 = arith.constant 0 : i32
    %c0_i32_1 = arith.constant 0 : i32
    return %c0_i32, %c0_i32_0 : i32, i32
  }
  func.func @transform_3(%arg0: i32) -> (i32, i32) {
    %c0_i32 = arith.constant 0 : i32
    %c0_i32_0 = arith.constant 0 : i32
    %c0_i32_1 = arith.constant 0 : i32
    return %c0_i32, %c0_i32_0 : i32, i32
  }
  func.func @transform_4(%arg0: i32) -> (i32, i32) {
    %c0_i32 = arith.constant 0 : i32
    %c0_i32_0 = arith.constant 0 : i32
    %c0_i32_1 = arith.constant 0 : i32
    return %c0_i32, %c0_i32_0 : i32, i32
  }
  func.func @transform_5(%arg0: i32) -> (i32, i32) {
    %c0_i32 = arith.constant 0 : i32
    %c0_i32_0 = arith.constant 0 : i32
    %c0_i32_1 = arith.constant 0 : i32
    return %c0_i32, %c0_i32_0 : i32, i32
  }
  func.func @transform_6(%arg0: i32) -> (i32, i32) {
    %c0_i32 = arith.constant 0 : i32
    %c0_i32_0 = arith.constant 0 : i32
    %c0_i32_1 = arith.constant 0 : i32
    return %c0_i32, %c0_i32_0 : i32, i32
  }
}

</mosaic_0001>

<llo_original>
// kernel: tpu_custom_call.1
$region0: #{tpu_custom_call.1}
  #allocation0 [shape = 'u32[]', space=smem, size = 0x4, offset = 0x4, fixed_abs, tag = 'smem constant byte address 0x4 - core index']
  #allocation1 [shape = 'u32[144,128]{1,0:T(1,128)}', space=vmem, size = 0x12000, scoped, tag = 'internal scratch']
  #allocation2 [shape = 'f32[64,256]{1,0:T(8,128)}', space=vmem, size = 0x10000, scoped, tag = 'scratch operand']
  #allocation3 [shape = 'f32[64,256]{1,0:T(8,128)}', space=vmem, size = 0x10000, scoped, tag = 'scratch operand']
  %s0 = inlined_call_operand.vmem [shape: f32[64,24], index: 0, kind: input, shape index: {}]
  %s1 = inlined_call_operand.vmem [shape: f32[24,256], index: 1, kind: input, shape index: {}]
  %s2 = inlined_call_operand.vmem [shape: f32[1,256], index: 2, kind: input, shape index: {}]
  %s3 = inlined_call_operand.hbm [shape: f32[256,256], index: 3, kind: input, shape index: {}]
  %s4 = inlined_call_operand.hbm [shape: f32[256,128], index: 4, kind: input, shape index: {}]
  %s5 = inlined_call_operand.vmem [shape: f32[1,128], index: 5, kind: input, shape index: {}]
  %s6 = inlined_call_operand.hbm [shape: f32[64,128], index: 6, kind: output, shape index: {}]
  %s7 = sld [smem:[#allocation0]]
  $region42: #{tpu_custom_call.1} parent=0
    _
  %s9 = ssub.s32 1, %s7
  %s10 = scalar_select 0, %s9, %s7
  $region1: #{tpu_custom_call.1} parent=0
    #allocation4 [shape = 'u8[262144]{0}', space=vmem, size = 0x40000, scoped, tag = 'input window, operand 3, single buffered']
    #allocation5 [shape = 's32[1]{0}', space=sflag, size = 0x4, scoped, tag = 'scoped memory for tpu_custom_call.1']
    #allocation6 [shape = 's32[1]{0}', space=sflag, size = 0x4, scoped, tag = 'scoped memory for tpu_custom_call.1']
    #allocation7 [shape = 'u8[131072]{0}', space=vmem, size = 0x20000, scoped, tag = 'input window, operand 4, single buffered']
    #allocation8 [shape = 's32[1]{0}', space=sflag, size = 0x4, scoped, tag = 'scoped memory for tpu_custom_call.1']
    #allocation9 [shape = 'u8[32768]{0}', space=vmem, size = 0x8000, scoped, tag = 'output window, operand 0, single buffered']
    %11 = vsyncpa [#allocation5], 0
    %12 = vsyncpa [#allocation8], 0
    %13 = vsyncpa [#allocation6], 0
    // Predicated region
    $region2: #{tpu_custom_call.1} parent=1 // pred_check
      _
    $region3: #{tpu_custom_call.1} parent=1 // pred_check_branch
      %15 = sbr.rel (0) target = $region5
    $region4: #{tpu_custom_call.1} parent=1 // pred_region
      _
    $region5: #{tpu_custom_call.1} parent=1 // pred_fallthru
      _
    // Predicated region
    $region6: #{tpu_custom_call.1} parent=1 // pred_check
      _
    $region7: #{tpu_custom_call.1} parent=1 // pred_check_branch
      %17 = sbr.rel (0) target = $region9
    $region8: #{tpu_custom_call.1} parent=1 // pred_region
      _
    $region9: #{tpu_custom_call.1} parent=1 // pred_fallthru
      _
    // Predicated region
    $region10: #{tpu_custom_call.1} parent=1 // pred_check
      _
    $region11: #{tpu_custom_call.1} parent=1 // pred_check_branch
      %19 = sbr.rel (0) target = $region13
    $region12: #{tpu_custom_call.1} parent=1 // pred_region
      _
    $region13: #{tpu_custom_call.1} parent=1 // pred_fallthru
      _
    // Predicated region
    $region14: #{tpu_custom_call.1} parent=1 // pred_check
      _
    $region15: #{tpu_custom_call.1} parent=1 // pred_check_branch
      %21 = sbr.rel (0) target = $region17
    $region16: #{tpu_custom_call.1} parent=1 // pred_region
      %s23 = ssub.s32 8192, 8192
      %24 = vsyncadd [#allocation5], %s23
      %s25 = sshll.u32 [#allocation4], 4
      %s26 = int_to_ptr.vmem [resolvable:$true] %s25
      %31 = dma.hbm_to_vmem [thread:$0]  %s3, 8192, %s26, [#allocation5], 256, 256, 16
    $region17: #{tpu_custom_call.1} parent=1 // pred_fallthru
      _
    // Predicated region
    $region18: #{tpu_custom_call.1} parent=1 // pred_check
      _
    $region19: #{tpu_custom_call.1} parent=1 // pred_check_branch
      %33 = sbr.rel (0) target = $region21
    $region20: #{tpu_custom_call.1} parent=1 // pred_region
      %s35 = ssub.s32 4096, 4096
      %36 = vsyncadd [#allocation8], %s35
      %s37 = sshll.u32 [#allocation7], 4
      %s38 = int_to_ptr.vmem [resolvable:$true] %s37
      %43 = dma.hbm_to_vmem [thread:$0]  %s4, 4096, %s38, [#allocation8], 128, 128, 8
    $region21: #{tpu_custom_call.1} parent=1 // pred_fallthru
      _
    // Predicated region
    $region22: #{tpu_custom_call.1} parent=1 // pred_check
      _
    $region23: #{tpu_custom_call.1} parent=1 // pred_check_branch
      %45 = sbr.rel (0) target = $region25
    $region24: #{tpu_custom_call.1} parent=1 // pred_region
      _
    $region25: #{tpu_custom_call.1} parent=1 // pred_fallthru
      _
    // Predicated region
    $region26: #{tpu_custom_call.1} parent=1 // pred_check
      _
    $region27: #{tpu_custom_call.1} parent=1 // pred_check_branch
      %47 = sbr.rel (0) target = $region29
    $region28: #{tpu_custom_call.1} parent=1 // pred_region
      %48 = dma.done [#allocation5], 8192
    $region29: #{tpu_custom_call.1} parent=1 // pred_fallthru
      _
    // Predicated region
    $region30: #{tpu_custom_call.1} parent=1 // pred_check
      _
    $region31: #{tpu_custom_call.1} parent=1 // pred_check_branch
      %50 = sbr.rel (0) target = $region33
    $region32: #{tpu_custom_call.1} parent=1 // pred_region
      %51 = dma.done [#allocation8], 4096
    $region33: #{tpu_custom_call.1} parent=1 // pred_fallthru
      _
    %v52 = vld [vmem:[%s0] sm:$0xff]
    %v53 = vld [vmem:[%s0 + $0x8] sm:$0xff]
    %v54 = vld [vmem:[%s0 + $0x10] sm:$0xff]
    %v55 = vld [vmem:[%s0 + $0x18] sm:$0xff]
    %v56 = vld [vmem:[%s0 + $0x20] sm:$0xff]
    %v57 = vld [vmem:[%s0 + $0x28] sm:$0xff]
    %v58 = vld [vmem:[%s0 + $0x30] sm:$0xff]
    %v59 = vld [vmem:[%s0 + $0x38] sm:$0xff]
    %v60 = vld [vmem:[%s1] sm:$0xff]
    %v61 = vld [vmem:[%s1 + $0x8] sm:$0xff]
    %v62 = vld [vmem:[%s1 + $0x10] sm:$0xff]
    %v63 = vld [vmem:[%s1 + $0x18] sm:$0xff]
    %v64 = vld [vmem:[%s1 + $0x20] sm:$0xff]
    %v65 = vld [vmem:[%s1 + $0x28] sm:$0xff]
    %v66 = vld [vmem:[%s2] sm:$0x3]
    %v68 = vlaneseq
    %v69 = vshrl.u32 %v68, 7
    %v70 = vsub.s32 0, %v69
    %v71 = vrot.slane %v66, %v70
    %v72 = vlaneseq
    %v73 = vshrl.u32 %v72, 7
    %v74 = vsub.s32 1, %v73
    %v75 = vrot.slane %v66, %v74
    %vm78 = vcmask 195584
    %v80 = vsel %vm78, %v52, 0
    %v83 = vsel %vm78, %v53, 0
    %v86 = vsel %vm78, %v54, 0
    %v89 = vsel %vm78, %v55, 0
    %v92 = vsel %vm78, %v56, 0
    %v95 = vsel %vm78, %v57, 0
    %v98 = vsel %vm78, %v58, 0
    %v101 = vsel %vm78, %v59, 0
    %103 = vmatprep.subr.mxu0 %v61
    %104 = vmatpush1.msra.mxu0 %v60
    %105 = vmatprep.subr.mxu0 %v63
    %106 = vmatpush1.msra.mxu0 %v62
    %107 = vmatprep.subr.mxu0 %v65
    %108 = vmatpush1.msra.mxu0 %v64
    %109 = vmatprep.subr.mxu0 0.0
    %110 = vmatpush1.msra.mxu0 0.0
    %111 = vmatprep.subr.mxu0 0.0
    %112 = vmatpush1.msra.mxu0 0.0
    %113 = vmatprep.subr.mxu0 0.0
    %114 = vmatpush1.msra.mxu0 0.0
    %115 = vmatprep.subr.mxu0 0.0
    %116 = vmatpush1.msra.mxu0 0.0
    %117 = vmatprep.subr.mxu0 0.0
    %118 = vmatpush1.msra.mxu0 0.0
    %119 = vmatprep.subr.mxu0 0.0
    %120 = vmatpush1.msra.mxu0 0.0
    %121 = vmatprep.subr.mxu0 0.0
    %122 = vmatpush1.msra.mxu0 0.0
    %123 = vmatprep.subr.mxu0 0.0
    %124 = vmatpush1.msra.mxu0 0.0
    %125 = vmatprep.subr.mxu0 0.0
    %126 = vmatpush1.msra.mxu0 0.0
    %127 = vmatprep.subr.mxu0 0.0
    %128 = vmatpush1.msra.mxu0 0.0
    %129 = vmatprep.subr.mxu0 0.0
    %130 = vmatpush1.msra.mxu0 0.0
    %131 = vmatprep.subr.mxu0 0.0
    %132 = vmatpush1.msra.mxu0 0.0
    %133 = vmatprep.subr.mxu0 0.0
    %134 = vmatpush1.msra.mxu0 0.0
    %135 = vmatprep.subr.mxu0 0.0
    %136 = vmatpush1.msra.mxu0 0.0
    %137 = vmatprep.subr.mxu0 0.0
    %138 = vmatpush1.msra.mxu0 0.0
    %139 = vmatprep.subr.mxu0 0.0
    %140 = vmatpush1.msra.mxu0 0.0
    %141 = vmatprep.subr.mxu0 0.0
    %142 = vmatpush1.msra.mxu0 0.0
    %143 = vmatprep.subr.mxu0 0.0
    %144 = vmatpush1.msra.mxu0 0.0
    %145 = vmatprep.subr.mxu0 0.0
    %146 = vmatpush1.msra.mxu0 0.0
    %147 = vmatprep.subr.mxu0 0.0
    %148 = vmatpush1.msra.mxu0 0.0
    %149 = vmatprep.subr.mxu0 0.0
    %150 = vmatpush1.msra.mxu0 0.0
    %151 = vmatprep.subr.mxu0 0.0
    %152 = vmatpush1.msra.mxu0 0.0
    %153 = vmatprep.subr.mxu0 0.0
    %154 = vmatpush1.msra.mxu0 0.0
    %155 = vmatprep.subr.mxu0 0.0
    %156 = vmatpush1.msra.mxu0 0.0
    %157 = vmatprep.subr.mxu0 0.0
    %158 = vmatpush1.msra.mxu0 0.0
    %159 = vmatprep.subr.mxu0 0.0
    %160 = vmatpush1.msra.mxu0 0.0
    %161 = vmatprep.subr.mxu0 0.0
    %162 = vmatpush1.msra.mxu0 0.0
    %163 = vmatprep.subr.mxu0 0.0
    %164 = vmatpush1.msra.mxu0 0.0
    %165 = vmatprep.subr.mxu0 0.0
    %166 = vmatpush1.msra.mxu0 0.0
    %167 = vmatprep.mubr.f32.mxu0 0.0
    %168 = vmatmul.mubr.f32.gmra.mrb[0].mxu0 %v80
    %v169 = vpop.f32.mrb[0].mxu0
    %v170 = vadd.f32 %v71, %v169
    %v171 = vpop.f32.mrb[0].mxu0
    %v172 = vadd.f32 %v75, %v171
    %173 = vmatprep.mubr.f32.mxu0 0.0
    %174 = vmatmul.mubr.f32.gmra.mrb[0].mxu0 %v83
    %v175 = vpop.f32.mrb[0].mxu0
    %v176 = vadd.f32 %v71, %v175
    %v177 = vpop.f32.mrb[0].mxu0
    %v178 = vadd.f32 %v75, %v177
    %179 = vmatprep.mubr.f32.mxu0 0.0
    %180 = vmatmul.mubr.f32.gmra.mrb[0].mxu0 %v86
    %v181 = vpop.f32.mrb[0].mxu0
    %v182 = vadd.f32 %v71, %v181
    %v183 = vpop.f32.mrb[0].mxu0
    %v184 = vadd.f32 %v75, %v183
    %185 = vmatprep.mubr.f32.mxu0 0.0
    %186 = vmatmul.mubr.f32.gmra.mrb[0].mxu0 %v89
    %v187 = vpop.f32.mrb[0].mxu0
    %v188 = vadd.f32 %v71, %v187
    %v189 = vpop.f32.mrb[0].mxu0
    %v190 = vadd.f32 %v75, %v189
    %191 = vmatprep.mubr.f32.mxu0 0.0
    %192 = vmatmul.mubr.f32.gmra.mrb[0].mxu0 %v92
    %v193 = vpop.f32.mrb[0].mxu0
    %v194 = vadd.f32 %v71, %v193
    %v195 = vpop.f32.mrb[0].mxu0
    %v196 = vadd.f32 %v75, %v195
    %197 = vmatprep.mubr.f32.mxu0 0.0
    %198 = vmatmul.mubr.f32.gmra.mrb[0].mxu0 %v95
    %v199 = vpop.f32.mrb[0].mxu0
    %v200 = vadd.f32 %v71, %v199
    %v201 = vpop.f32.mrb[0].mxu0
    %v202 = vadd.f32 %v75, %v201
    %203 = vmatprep.mubr.f32.mxu0 0.0
    %204 = vmatmul.mubr.f32.gmra.mrb[0].mxu0 %v98
    %v205 = vpop.f32.mrb[0].mxu0
    %v206 = vadd.f32 %v71, %v205
    %v207 = vpop.f32.mrb[0].mxu0
    %v208 = vadd.f32 %v75, %v207
    %209 = vmatprep.mubr.f32.mxu0 0.0
    %210 = vmatmul.mubr.f32.gmra.mrb[0].mxu0 %v101
    %v211 = vpop.f32.mrb[0].mxu0
    %v212 = vadd.f32 %v71, %v211
    %v213 = vpop.f32.mrb[0].mxu0
    %v214 = vadd.f32 %v75, %v213
    %215 = vdwg.mxu0
    %216 = vst [vmem:[#allocation2] sm:$0xff] %v170
    %217 = vst [vmem:[#allocation2 + $0x8] sm:$0xff] %v172
    %218 = vst [vmem:[#allocation2 + $0x10] sm:$0xff] %v176
    %219 = vst [vmem:[#allocation2 + $0x18] sm:$0xff] %v178
    %220 = vst [vmem:[#allocation2 + $0x20] sm:$0xff] %v182
    %221 = vst [vmem:[#allocation2 + $0x28] sm:$0xff] %v184
    %222 = vst [vmem:[#allocation2 + $0x30] sm:$0xff] %v188
    %223 = vst [vmem:[#allocation2 + $0x38] sm:$0xff] %v190
    %224 = vst [vmem:[#allocation2 + $0x40] sm:$0xff] %v194
    %225 = vst [vmem:[#allocation2 + $0x48] sm:$0xff] %v196
    %226 = vst [vmem:[#allocation2 + $0x50] sm:$0xff] %v200
    %227 = vst [vmem:[#allocation2 + $0x58] sm:$0xff] %v202
    %228 = vst [vmem:[#allocation2 + $0x60] sm:$0xff] %v206
    %229 = vst [vmem:[#allocation2 + $0x68] sm:$0xff] %v208
    %230 = vst [vmem:[#allocation2 + $0x70] sm:$0xff] %v212
    %231 = vst [vmem:[#allocation2 + $0x78] sm:$0xff] %v214
    %v232 = vld [vmem:[#allocation4] sm:$0xff]
    %v233 = vld [vmem:[#allocation4 + $0x8] sm:$0xff]
    %v234 = vld [vmem:[#allocation4 + $0x10] sm:$0xff]
    %v235 = vld [vmem:[#allocation4 + $0x18] sm:$0xff]
    %v236 = vld [vmem:[#allocation4 + $0x20] sm:$0xff]
    %v237 = vld [vmem:[#allocation4 + $0x28] sm:$0xff]
    %v238 = vld [vmem:[#allocation4 + $0x30] sm:$0xff]
    %v239 = vld [vmem:[#allocation4 + $0x38] sm:$0xff]
    %v240 = vld [vmem:[#allocation4 + $0x40] sm:$0xff]
    %v241 = vld [vmem:[#allocation4 + $0x48] sm:$0xff]
    %v242 = vld [vmem:[#allocation4 + $0x50] sm:$0xff]
    %v243 = vld [vmem:[#allocation4 + $0x58] sm:$0xff]
    %v244 = vld [vmem:[#allocation4 + $0x60] sm:$0xff]
    %v245 = vld [vmem:[#allocation4 + $0x68] sm:$0xff]
    %v246 = vld [vmem:[#allocation4 + $0x70] sm:$0xff]
    %v247 = vld [vmem:[#allocation4 + $0x78] sm:$0xff]
    %v248 = vld [vmem:[#allocation4 + $0x80] sm:$0xff]
    %v249 = vld [vmem:[#allocation4 + $0x88] sm:$0xff]
    %v250 = vld [vmem:[#allocation4 + $0x90] sm:$0xff]
    %v251 = vld [vmem:[#allocation4 + $0x98] sm:$0xff]
    %v252 = vld [vmem:[#allocation4 + $0xa0] sm:$0xff]
    %v253 = vld [vmem:[#allocation4 + $0xa8] sm:$0xff]
    %v254 = vld [vmem:[#allocation4 + $0xb0] sm:$0xff]
    %v255 = vld [vmem:[#allocation4 + $0xb8] sm:$0xff]
    %v256 = vld [vmem:[#allocation4 + $0xc0] sm:$0xff]
    %v257 = vld [vmem:[#allocation4 + $0xc8] sm:$0xff]
    %v258 = vld [vmem:[#allocation4 + $0xd0] sm:$0xff]
    %v259 = vld [vmem:[#allocation4 + $0xd8] sm:$0xff]
    %v260 = vld [vmem:[#allocation4 + $0xe0] sm:$0xff]
    %v261 = vld [vmem:[#allocation4 + $0xe8] sm:$0xff]
    %v262 = vld [vmem:[#allocation4 + $0xf0] sm:$0xff]
    %v263 = vld [vmem:[#allocation4 + $0xf8] sm:$0xff]
    %v264 = vld [vmem:[#allocation4 + $0x100] sm:$0xff]
    %v265 = vld [vmem:[#allocation4 + $0x108] sm:$0xff]
    %v266 = vld [vmem:[#allocation4 + $0x110] sm:$0xff]
    %v267 = vld [vmem:[#allocation4 + $0x118] sm:$0xff]
    %v268 = vld [vmem:[#allocation4 + $0x120] sm:$0xff]
    %v269 = vld [vmem:[#allocation4 + $0x128] sm:$0xff]
    %v270 = vld [vmem:[#allocation4 + $0x130] sm:$0xff]
    %v271 = vld [vmem:[#allocation4 + $0x138] sm:$0xff]
    %v272 = vld [vmem:[#allocation4 + $0x140] sm:$0xff]
    %v273 = vld [vmem:[#allocation4 + $0x148] sm:$0xff]
    %v274 = vld [vmem:[#allocation4 + $0x150] sm:$0xff]
    %v275 = vld [vmem:[#allocation4 + $0x158] sm:$0xff]
    %v276 = vld [vmem:[#allocation4 + $0x160] sm:$0xff]
    %v277 = vld [vmem:[#allocation4 + $0x168] sm:$0xff]
    %v278 = vld [vmem:[#allocation4 + $0x170] sm:$0xff]
    %v279 = vld [vmem:[#allocation4 + $0x178] sm:$0xff]
    %v280 = vld [vmem:[#allocation4 + $0x180] sm:$0xff]
    %v281 = vld [vmem:[#allocation4 + $0x188] sm:$0xff]
    %v282 = vld [vmem:[#allocation4 + $0x190] sm:$0xff]
    %v283 = vld [vmem:[#allocation4 + $0x198] sm:$0xff]
    %v284 = vld [vmem:[#allocation4 + $0x1a0] sm:$0xff]
    %v285 = vld [vmem:[#allocation4 + $0x1a8] sm:$0xff]
    %v286 = vld [vmem:[#allocation4 + $0x1b0] sm:$0xff]
    %v287 = vld [vmem:[#allocation4 + $0x1b8] sm:$0xff]
    %v288 = vld [vmem:[#allocation4 + $0x1c0] sm:$0xff]
    %v289 = vld [vmem:[#allocation4 + $0x1c8] sm:$0xff]
    %v290 = vld [vmem:[#allocation4 + $0x1d0] sm:$0xff]
    %v291 = vld [vmem:[#allocation4 + $0x1d8] sm:$0xff]
    %v292 = vld [vmem:[#allocation4 + $0x1e0] sm:$0xff]
    %v293 = vld [vmem:[#allocation4 + $0x1e8] sm:$0xff]
    %v294 = vld [vmem:[#allocation4 + $0x1f0] sm:$0xff]
    %v295 = vld [vmem:[#allocation4 + $0x1f8] sm:$0xff]
    %v296 = vld [vmem:[#allocation2] sm:$0xff]
    %v297 = vtanh.pop %v296
    %298 = vst [vmem:[#allocation3] sm:$0xff] %v297
    %s299 = smul.u32 1, 2
    %s300 = smul.addr %s299, 8
    %s301 = scalar_lea.vmem [#allocation2], %s300
    %v302 = vld [vmem:[%s301] sm:$0xff]
    %v303 = vld [vmem:[%s301 + $0x8] sm:$0xff]
    %304 = vmatprep.subr.mxu0 %v233
    %305 = vmatpush1.msra.mxu0 %v232
    %306 = vmatprep.subr.mxu0 %v235
    %307 = vmatpush1.msra.mxu0 %v234
    %308 = vmatprep.subr.mxu0 %v237
    %309 = vmatpush1.msra.mxu0 %v236
    %310 = vmatprep.subr.mxu0 %v239
    %311 = vmatpush1.msra.mxu0 %v238
    %312 = vmatprep.subr.mxu0 %v241
    %313 = vmatpush1.msra.mxu0 %v240
    %314 = vmatprep.subr.mxu0 %v243
    %315 = vmatpush1.msra.mxu0 %v242
    %316 = vmatprep.subr.mxu0 %v245
    %317 = vmatpush1.msra.mxu0 %v244
    %318 = vmatprep.subr.mxu0 %v247
    %319 = vmatpush1.msra.mxu0 %v246
    %320 = vmatprep.subr.mxu0 %v249
    %321 = vmatpush1.msra.mxu0 %v248
    %322 = vmatprep.subr.mxu0 %v251
    %323 = vmatpush1.msra.mxu0 %v250
    %324 = vmatprep.subr.mxu0 %v253
    %325 = vmatpush1.msra.mxu0 %v252
    %326 = vmatprep.subr.mxu0 %v255
    %327 = vmatpush1.msra.mxu0 %v254
    %328 = vmatprep.subr.mxu0 %v257
    %329 = vmatpush1.msra.mxu0 %v256
    %330 = vmatprep.subr.mxu0 %v259
    %331 = vmatpush1.msra.mxu0 %v258
    %332 = vmatprep.subr.mxu0 %v261
    %333 = vmatpush1.msra.mxu0 %v260
    %334 = vmatprep.subr.mxu0 %v263
    %335 = vmatpush1.msra.mxu0 %v262
    %336 = vmatprep.subr.mxu0 %v265
    %337 = vmatpush1.msra.mxu0 %v264
    %338 = vmatprep.subr.mxu0 %v267
    %339 = vmatpush1.msra.mxu0 %v266
    %340 = vmatprep.subr.mxu0 %v269
    %341 = vmatpush1.msra.mxu0 %v268
    %342 = vmatprep.subr.mxu0 %v271
    %343 = vmatpush1.msra.mxu0 %v270
    %344 = vmatprep.subr.mxu0 %v273
    %345 = vmatpush1.msra.mxu0 %v272
    %346 = vmatprep.subr.mxu0 %v275
    %347 = vmatpush1.msra.mxu0 %v274
    %348 = vmatprep.subr.mxu0 %v277
    %349 = vmatpush1.msra.mxu0 %v276
    %350 = vmatprep.subr.mxu0 %v279
    %351 = vmatpush1.msra.mxu0 %v278
    %352 = vmatprep.subr.mxu0 %v281
    %353 = vmatpush1.msra.mxu0 %v280
    %354 = vmatprep.subr.mxu0 %v283
    %355 = vmatpush1.msra.mxu0 %v282
    %356 = vmatprep.subr.mxu0 %v285
    %357 = vmatpush1.msra.mxu0 %v284
    %358 = vmatprep.subr.mxu0 %v287
    %359 = vmatpush1.msra.mxu0 %v286
    %360 = vmatprep.subr.mxu0 %v289
    %361 = vmatpush1.msra.mxu0 %v288
    %362 = vmatprep.subr.mxu0 %v291
    %363 = vmatpush1.msra.mxu0 %v290
    %364 = vmatprep.subr.mxu0 %v293
    %365 = vmatpush1.msra.mxu0 %v292
    %366 = vmatprep.subr.mxu0 %v295
    %367 = vmatpush1.msra.mxu0 %v294
    %368 = vmatprep.mubr.f32.mxu0 0.0
    %369 = vmatmul.mubr.f32.gmra.mrb[0].mxu0 %v297
    %v370 = vpop.f32.mrb[0].mxu0
    %v371 = vadd.f32 0.0, %v370
    %v372 = vpop.f32.mrb[0].mxu0
    %v373 = vadd.f32 0.0, %v372
    %374 = vdwg.mxu0
    %v375 = vadd.f32 %v302, %v371
    %v376 = vadd.f32 %v303, %v373
    %v377 = vtanh.pop %v375
    %v378 = vtanh.pop %v376
    %s379 = smul.addr %s299, 8
    %s380 = scalar_lea.vmem [#allocation3], %s379
    %381 = vst [vmem:[%s380] sm:$0xff] %v377
    %s382 = smul.u32 0, 2
    %s383 = smul.addr %s382, 8
    %s384 = scalar_lea.vmem [#allocation3], %s383
    %385 = vst [vmem:[%s384 + $0x8] sm:$0xff] %v378
    %s386 = smul.u32 2, 2
    %s387 = smul.addr %s386, 8
    %s388 = scalar_lea.vmem [#allocation2], %s387
    %v389 = vld [vmem:[%s388] sm:$0xff]
    %v390 = vld [vmem:[%s388 + $0x8] sm:$0xff]
    %391 = vmatprep.subr.mxu0 %v233
    %392 = vmatpush1.msra.mxu0 %v232
    %393 = vmatprep.subr.mxu0 %v235
    %394 = vmatpush1.msra.mxu0 %v234
    %395 = vmatprep.subr.mxu0 %v237
    %396 = vmatpush1.msra.mxu0 %v236
    %397 = vmatprep.subr.mxu0 %v239
    %398 = vmatpush1.msra.mxu0 %v238
    %399 = vmatprep.subr.mxu0 %v241
    %400 = vmatpush1.msra.mxu0 %v240
    %401 = vmatprep.subr.mxu0 %v243
    %402 = vmatpush1.msra.mxu0 %v242
    %403 = vmatprep.subr.mxu0 %v245
    %404 = vmatpush1.msra.mxu0 %v244
    %405 = vmatprep.subr.mxu0 %v247
    %406 = vmatpush1.msra.mxu0 %v246
    %407 = vmatprep.subr.mxu0 %v249
    %408 = vmatpush1.msra.mxu0 %v248
    %409 = vmatprep.subr.mxu0 %v251
    %410 = vmatpush1.msra.mxu0 %v250
    %411 = vmatprep.subr.mxu0 %v253
    %412 = vmatpush1.msra.mxu0 %v252
    %413 = vmatprep.subr.mxu0 %v255
    %414 = vmatpush1.msra.mxu0 %v254
    %415 = vmatprep.subr.mxu0 %v257
    %416 = vmatpush1.msra.mxu0 %v256
    %417 = vmatprep.subr.mxu0 %v259
    %418 = vmatpush1.msra.mxu0 %v258
    %419 = vmatprep.subr.mxu0 %v261
    %420 = vmatpush1.msra.mxu0 %v260
    %421 = vmatprep.subr.mxu0 %v263
    %422 = vmatpush1.msra.mxu0 %v262
    %423 = vmatprep.subr.mxu0 %v265
    %424 = vmatpush1.msra.mxu0 %v264
    %425 = vmatprep.subr.mxu0 %v267
    %426 = vmatpush1.msra.mxu0 %v266
    %427 = vmatprep.subr.mxu0 %v269
    %428 = vmatpush1.msra.mxu0 %v268
    %429 = vmatprep.subr.mxu0 %v271
    %430 = vmatpush1.msra.mxu0 %v270
    %431 = vmatprep.subr.mxu0 %v273
    %432 = vmatpush1.msra.mxu0 %v272
    %433 = vmatprep.subr.mxu0 %v275
    %434 = vmatpush1.msra.mxu0 %v274
    %435 = vmatprep.subr.mxu0 %v277
    %436 = vmatpush1.msra.mxu0 %v276
    %437 = vmatprep.subr.mxu0 %v279
    %438 = vmatpush1.msra.mxu0 %v278
    %439 = vmatprep.subr.mxu0 %v281
    %440 = vmatpush1.msra.mxu0 %v280
    %441 = vmatprep.subr.mxu0 %v283
    %442 = vmatpush1.msra.mxu0 %v282
    %443 = vmatprep.subr.mxu0 %v285
    %444 = vmatpush1.msra.mxu0 %v284
    %445 = vmatprep.subr.mxu0 %v287
    %446 = vmatpush1.msra.mxu0 %v286
    %447 = vmatprep.subr.mxu0 %v289
    %448 = vmatpush1.msra.mxu0 %v288
    %449 = vmatprep.subr.mxu0 %v291
    %450 = vmatpush1.msra.mxu0 %v290
    %451 = vmatprep.subr.mxu0 %v293
    %452 = vmatpush1.msra.mxu0 %v292
    %453 = vmatprep.subr.mxu0 %v295
    %454 = vmatpush1.msra.mxu0 %v294
    %455 = vmatprep.mubr.f32.mxu0 %v378
    %456 = vmatmul.mubr.f32.gmra.mrb[0].mxu0 %v377
    %v457 = vpop.f32.mrb[0].mxu0
    %v458 = vadd.f32 0.0, %v457
    %v459 = vpop.f32.mrb[0].mxu0
    %v460 = vadd.f32 0.0, %v459
    %461 = vdwg.mxu0
    %v462 = vadd.f32 %v389, %v458
    %v463 = vadd.f32 %v390, %v460
    %v464 = vtanh.pop %v462
    %v465 = vtanh.pop %v463
    %s466 = smul.addr %s386, 8
    %s467 = scalar_lea.vmem [#allocation3], %s466
    %468 = vst [vmem:[%s467] sm:$0xff] %v464
    %469 = vst [vmem:[%s380 + $0x8] sm:$0xff] %v465
    %s470 = smul.u32 3, 2
    %s471 = smul.addr %s470, 8
    %s472 = scalar_lea.vmem [#allocation2], %s471
    %v473 = vld [vmem:[%s472] sm:$0xff]
    %v474 = vld [vmem:[%s472 + $0x8] sm:$0xff]
    %475 = vmatprep.subr.mxu0 %v233
    %476 = vmatpush1.msra.mxu0 %v232
    %477 = vmatprep.subr.mxu0 %v235
    %478 = vmatpush1.msra.mxu0 %v234
    %479 = vmatprep.subr.mxu0 %v237
    %480 = vmatpush1.msra.mxu0 %v236
    %481 = vmatprep.subr.mxu0 %v239
    %482 = vmatpush1.msra.mxu0 %v238
    %483 = vmatprep.subr.mxu0 %v241
    %484 = vmatpush1.msra.mxu0 %v240
    %485 = vmatprep.subr.mxu0 %v243
    %486 = vmatpush1.msra.mxu0 %v242
    %487 = vmatprep.subr.mxu0 %v245
    %488 = vmatpush1.msra.mxu0 %v244
    %489 = vmatprep.subr.mxu0 %v247
    %490 = vmatpush1.msra.mxu0 %v246
    %491 = vmatprep.subr.mxu0 %v249
    %492 = vmatpush1.msra.mxu0 %v248
    %493 = vmatprep.subr.mxu0 %v251
    %494 = vmatpush1.msra.mxu0 %v250
    %495 = vmatprep.subr.mxu0 %v253
    %496 = vmatpush1.msra.mxu0 %v252
    %497 = vmatprep.subr.mxu0 %v255
    %498 = vmatpush1.msra.mxu0 %v254
    %499 = vmatprep.subr.mxu0 %v257
    %500 = vmatpush1.msra.mxu0 %v256
    %501 = vmatprep.subr.mxu0 %v259
    %502 = vmatpush1.msra.mxu0 %v258
    %503 = vmatprep.subr.mxu0 %v261
    %504 = vmatpush1.msra.mxu0 %v260
    %505 = vmatprep.subr.mxu0 %v263
    %506 = vmatpush1.msra.mxu0 %v262
    %507 = vmatprep.subr.mxu0 %v265
    %508 = vmatpush1.msra.mxu0 %v264
    %509 = vmatprep.subr.mxu0 %v267
    %510 = vmatpush1.msra.mxu0 %v266
    %511 = vmatprep.subr.mxu0 %v269
    %512 = vmatpush1.msra.mxu0 %v268
    %513 = vmatprep.subr.mxu0 %v271
    %514 = vmatpush1.msra.mxu0 %v270
    %515 = vmatprep.subr.mxu0 %v273
    %516 = vmatpush1.msra.mxu0 %v272
    %517 = vmatprep.subr.mxu0 %v275
    %518 = vmatpush1.msra.mxu0 %v274
    %519 = vmatprep.subr.mxu0 %v277
    %520 = vmatpush1.msra.mxu0 %v276
    %521 = vmatprep.subr.mxu0 %v279
    %522 = vmatpush1.msra.mxu0 %v278
    %523 = vmatprep.subr.mxu0 %v281
    %524 = vmatpush1.msra.mxu0 %v280
    %525 = vmatprep.subr.mxu0 %v283
    %526 = vmatpush1.msra.mxu0 %v282
    %527 = vmatprep.subr.mxu0 %v285
    %528 = vmatpush1.msra.mxu0 %v284
    %529 = vmatprep.subr.mxu0 %v287
    %530 = vmatpush1.msra.mxu0 %v286
    %531 = vmatprep.subr.mxu0 %v289
    %532 = vmatpush1.msra.mxu0 %v288
    %533 = vmatprep.subr.mxu0 %v291
    %534 = vmatpush1.msra.mxu0 %v290
    %535 = vmatprep.subr.mxu0 %v293
    %536 = vmatpush1.msra.mxu0 %v292
    %537 = vmatprep.subr.mxu0 %v295
    %538 = vmatpush1.msra.mxu0 %v294
    %539 = vmatprep.mubr.f32.mxu0 %v465
    %540 = vmatmul.mubr.f32.gmra.mrb[0].mxu0 %v464
    %v541 = vpop.f32.mrb[0].mxu0
    %v542 = vadd.f32 0.0, %v541
    %v543 = vpop.f32.mrb[0].mxu0
    %v544 = vadd.f32 0.0, %v543
    %545 = vdwg.mxu0
    %v546 = vadd.f32 %v473, %v542
    %v547 = vadd.f32 %v474, %v544
    %v548 = vtanh.pop %v546
    %v549 = vtanh.pop %v547
    %s550 = smul.addr %s470, 8
    %s551 = scalar_lea.vmem [#allocation3], %s550
    %552 = vst [vmem:[%s551] sm:$0xff] %v548
    %553 = vst [vmem:[%s467 + $0x8] sm:$0xff] %v549
    %s554 = smul.u32 4, 2
    %s555 = smul.addr %s554, 8
    %s556 = scalar_lea.vmem [#allocation2], %s555
    %v557 = vld [vmem:[%s556] sm:$0xff]
    %v558 = vld [vmem:[%s556 + $0x8] sm:$0xff]
    %559 = vmatprep.subr.mxu0 %v233
    %560 = vmatpush1.msra.mxu0 %v232
    %561 = vmatprep.subr.mxu0 %v235
    %562 = vmatpush1.msra.mxu0 %v234
    %563 = vmatprep.subr.mxu0 %v237
    %564 = vmatpush1.msra.mxu0 %v236
    %565 = vmatprep.subr.mxu0 %v239
    %566 = vmatpush1.msra.mxu0 %v238
    %567 = vmatprep.subr.mxu0 %v241
    %568 = vmatpush1.msra.mxu0 %v240
    %569 = vmatprep.subr.mxu0 %v243
    %570 = vmatpush1.msra.mxu0 %v242
    %571 = vmatprep.subr.mxu0 %v245
    %572 = vmatpush1.msra.mxu0 %v244
    %573 = vmatprep.subr.mxu0 %v247
    %574 = vmatpush1.msra.mxu0 %v246
    %575 = vmatprep.subr.mxu0 %v249
    %576 = vmatpush1.msra.mxu0 %v248
    %577 = vmatprep.subr.mxu0 %v251
    %578 = vmatpush1.msra.mxu0 %v250
    %579 = vmatprep.subr.mxu0 %v253
    %580 = vmatpush1.msra.mxu0 %v252
    %581 = vmatprep.subr.mxu0 %v255
    %582 = vmatpush1.msra.mxu0 %v254
    %583 = vmatprep.subr.mxu0 %v257
    %584 = vmatpush1.msra.mxu0 %v256
    %585 = vmatprep.subr.mxu0 %v259
    %586 = vmatpush1.msra.mxu0 %v258
    %587 = vmatprep.subr.mxu0 %v261
    %588 = vmatpush1.msra.mxu0 %v260
    %589 = vmatprep.subr.mxu0 %v263
    %590 = vmatpush1.msra.mxu0 %v262
    %591 = vmatprep.subr.mxu0 %v265
    %592 = vmatpush1.msra.mxu0 %v264
    %593 = vmatprep.subr.mxu0 %v267
    %594 = vmatpush1.msra.mxu0 %v266
    %595 = vmatprep.subr.mxu0 %v269
    %596 = vmatpush1.msra.mxu0 %v268
    %597 = vmatprep.subr.mxu0 %v271
    %598 = vmatpush1.msra.mxu0 %v270
    %599 = vmatprep.subr.mxu0 %v273
    %600 = vmatpush1.msra.mxu0 %v272
    %601 = vmatprep.subr.mxu0 %v275
    %602 = vmatpush1.msra.mxu0 %v274
    %603 = vmatprep.subr.mxu0 %v277
    %604 = vmatpush1.msra.mxu0 %v276
    %605 = vmatprep.subr.mxu0 %v279
    %606 = vmatpush1.msra.mxu0 %v278
    %607 = vmatprep.subr.mxu0 %v281
    %608 = vmatpush1.msra.mxu0 %v280
    %609 = vmatprep.subr.mxu0 %v283
    %610 = vmatpush1.msra.mxu0 %v282
    %611 = vmatprep.subr.mxu0 %v285
    %612 = vmatpush1.msra.mxu0 %v284
    %613 = vmatprep.subr.mxu0 %v287
    %614 = vmatpush1.msra.mxu0 %v286
    %615 = vmatprep.subr.mxu0 %v289
    %616 = vmatpush1.msra.mxu0 %v288
    %617 = vmatprep.subr.mxu0 %v291
    %618 = vmatpush1.msra.mxu0 %v290
    %619 = vmatprep.subr.mxu0 %v293
    %620 = vmatpush1.msra.mxu0 %v292
    %621 = vmatprep.subr.mxu0 %v295
    %622 = vmatpush1.msra.mxu0 %v294
    %623 = vmatprep.mubr.f32.mxu0 %v549
    %624 = vmatmul.mubr.f32.gmra.mrb[0].mxu0 %v548
    %v625 = vpop.f32.mrb[0].mxu0
    %v626 = vadd.f32 0.0, %v625
    %v627 = vpop.f32.mrb[0].mxu0
    %v628 = vadd.f32 0.0, %v627
    %629 = vdwg.mxu0
    %v630 = vadd.f32 %v557, %v626
    %v631 = vadd.f32 %v558, %v628
    %v632 = vtanh.pop %v630
    %v633 = vtanh.pop %v631
    %s634 = smul.addr %s554, 8
    %s635 = scalar_lea.vmem [#allocation3], %s634
    %636 = vst [vmem:[%s635] sm:$0xff] %v632
    %637 = vst [vmem:[%s551 + $0x8] sm:$0xff] %v633
    %s638 = smul.u32 5, 2
    %s639 = smul.addr %s638, 8
    %s640 = scalar_lea.vmem [#allocation2], %s639
    %v641 = vld [vmem:[%s640] sm:$0xff]
    %v642 = vld [vmem:[%s640 + $0x8] sm:$0xff]
    %643 = vmatprep.subr.mxu0 %v233
    %644 = vmatpush1.msra.mxu0 %v232
    %645 = vmatprep.subr.mxu0 %v235
    %646 = vmatpush1.msra.mxu0 %v234
    %647 = vmatprep.subr.mxu0 %v237
    %648 = vmatpush1.msra.mxu0 %v236
    %649 = vmatprep.subr.mxu0 %v239
    %650 = vmatpush1.msra.mxu0 %v238
    %651 = vmatprep.subr.mxu0 %v241
    %652 = vmatpush1.msra.mxu0 %v240
    %653 = vmatprep.subr.mxu0 %v243
    %654 = vmatpush1.msra.mxu0 %v242
    %655 = vmatprep.subr.mxu0 %v245
    %656 = vmatpush1.msra.mxu0 %v244
    %657 = vmatprep.subr.mxu0 %v247
    %658 = vmatpush1.msra.mxu0 %v246
    %659 = vmatprep.subr.mxu0 %v249
    %660 = vmatpush1.msra.mxu0 %v248
    %661 = vmatprep.subr.mxu0 %v251
    %662 = vmatpush1.msra.mxu0 %v250
    %663 = vmatprep.subr.mxu0 %v253
    %664 = vmatpush1.msra.mxu0 %v252
    %665 = vmatprep.subr.mxu0 %v255
    %666 = vmatpush1.msra.mxu0 %v254
    %667 = vmatprep.subr.mxu0 %v257
    %668 = vmatpush1.msra.mxu0 %v256
    %669 = vmatprep.subr.mxu0 %v259
    %670 = vmatpush1.msra.mxu0 %v258
    %671 = vmatprep.subr.mxu0 %v261
    %672 = vmatpush1.msra.mxu0 %v260
    %673 = vmatprep.subr.mxu0 %v263
    %674 = vmatpush1.msra.mxu0 %v262
    %675 = vmatprep.subr.mxu0 %v265
    %676 = vmatpush1.msra.mxu0 %v264
    %677 = vmatprep.subr.mxu0 %v267
    %678 = vmatpush1.msra.mxu0 %v266
    %679 = vmatprep.subr.mxu0 %v269
    %680 = vmatpush1.msra.mxu0 %v268
    %681 = vmatprep.subr.mxu0 %v271
    %682 = vmatpush1.msra.mxu0 %v270
    %683 = vmatprep.subr.mxu0 %v273
    %684 = vmatpush1.msra.mxu0 %v272
    %685 = vmatprep.subr.mxu0 %v275
    %686 = vmatpush1.msra.mxu0 %v274
    %687 = vmatprep.subr.mxu0 %v277
    %688 = vmatpush1.msra.mxu0 %v276
    %689 = vmatprep.subr.mxu0 %v279
    %690 = vmatpush1.msra.mxu0 %v278
    %691 = vmatprep.subr.mxu0 %v281
    %692 = vmatpush1.msra.mxu0 %v280
    %693 = vmatprep.subr.mxu0 %v283
    %694 = vmatpush1.msra.mxu0 %v282
    %695 = vmatprep.subr.mxu0 %v285
    %696 = vmatpush1.msra.mxu0 %v284
    %697 = vmatprep.subr.mxu0 %v287
    %698 = vmatpush1.msra.mxu0 %v286
    %699 = vmatprep.subr.mxu0 %v289
    %700 = vmatpush1.msra.mxu0 %v288
    %701 = vmatprep.subr.mxu0 %v291
    %702 = vmatpush1.msra.mxu0 %v290
    %703 = vmatprep.subr.mxu0 %v293
    %704 = vmatpush1.msra.mxu0 %v292
    %705 = vmatprep.subr.mxu0 %v295
    %706 = vmatpush1.msra.mxu0 %v294
    %707 = vmatprep.mubr.f32.mxu0 %v633
    %708 = vmatmul.mubr.f32.gmra.mrb[0].mxu0 %v632
    %v709 = vpop.f32.mrb[0].mxu0
    %v710 = vadd.f32 0.0, %v709
    %v711 = vpop.f32.mrb[0].mxu0
    %v712 = vadd.f32 0.0, %v711
    %713 = vdwg.mxu0
    %v714 = vadd.f32 %v641, %v710
    %v715 = vadd.f32 %v642, %v712
    %v716 = vtanh.pop %v714
    %v717 = vtanh.pop %v715
    %s718 = smul.addr %s638, 8
    %s719 = scalar_lea.vmem [#allocation3], %s718
    %720 = vst [vmem:[%s719] sm:$0xff] %v716
    %721 = vst [vmem:[%s635 + $0x8] sm:$0xff] %v717
    %s722 = smul.u32 6, 2
    %s723 = smul.addr %s722, 8
    %s724 = scalar_lea.vmem [#allocation2], %s723
    %v725 = vld [vmem:[%s724] sm:$0xff]
    %v726 = vld [vmem:[%s724 + $0x8] sm:$0xff]
    %727 = vmatprep.subr.mxu0 %v233
    %728 = vmatpush1.msra.mxu0 %v232
    %729 = vmatprep.subr.mxu0 %v235
    %730 = vmatpush1.msra.mxu0 %v234
    %731 = vmatprep.subr.mxu0 %v237
    %732 = vmatpush1.msra.mxu0 %v236
    %733 = vmatprep.subr.mxu0 %v239
    %734 = vmatpush1.msra.mxu0 %v238
    %735 = vmatprep.subr.mxu0 %v241
    %736 = vmatpush1.msra.mxu0 %v240
    %737 = vmatprep.subr.mxu0 %v243
    %738 = vmatpush1.msra.mxu0 %v242
    %739 = vmatprep.subr.mxu0 %v245
    %740 = vmatpush1.msra.mxu0 %v244
    %741 = vmatprep.subr.mxu0 %v247
    %742 = vmatpush1.msra.mxu0 %v246
    %743 = vmatprep.subr.mxu0 %v249
    %744 = vmatpush1.msra.mxu0 %v248
    %745 = vmatprep.subr.mxu0 %v251
    %746 = vmatpush1.msra.mxu0 %v250
    %747 = vmatprep.subr.mxu0 %v253
    %748 = vmatpush1.msra.mxu0 %v252
    %749 = vmatprep.subr.mxu0 %v255
    %750 = vmatpush1.msra.mxu0 %v254
    %751 = vmatprep.subr.mxu0 %v257
    %752 = vmatpush1.msra.mxu0 %v256
    %753 = vmatprep.subr.mxu0 %v259
    %754 = vmatpush1.msra.mxu0 %v258
    %755 = vmatprep.subr.mxu0 %v261
    %756 = vmatpush1.msra.mxu0 %v260
    %757 = vmatprep.subr.mxu0 %v263
    %758 = vmatpush1.msra.mxu0 %v262
    %759 = vmatprep.subr.mxu0 %v265
    %760 = vmatpush1.msra.mxu0 %v264
    %761 = vmatprep.subr.mxu0 %v267
    %762 = vmatpush1.msra.mxu0 %v266
    %763 = vmatprep.subr.mxu0 %v269
    %764 = vmatpush1.msra.mxu0 %v268
    %765 = vmatprep.subr.mxu0 %v271
    %766 = vmatpush1.msra.mxu0 %v270
    %767 = vmatprep.subr.mxu0 %v273
    %768 = vmatpush1.msra.mxu0 %v272
    %769 = vmatprep.subr.mxu0 %v275
    %770 = vmatpush1.msra.mxu0 %v274
    %771 = vmatprep.subr.mxu0 %v277
    %772 = vmatpush1.msra.mxu0 %v276
    %773 = vmatprep.subr.mxu0 %v279
    %774 = vmatpush1.msra.mxu0 %v278
    %775 = vmatprep.subr.mxu0 %v281
    %776 = vmatpush1.msra.mxu0 %v280
    %777 = vmatprep.subr.mxu0 %v283
    %778 = vmatpush1.msra.mxu0 %v282
    %779 = vmatprep.subr.mxu0 %v285
    %780 = vmatpush1.msra.mxu0 %v284
    %781 = vmatprep.subr.mxu0 %v287
    %782 = vmatpush1.msra.mxu0 %v286
    %783 = vmatprep.subr.mxu0 %v289
    %784 = vmatpush1.msra.mxu0 %v288
    %785 = vmatprep.subr.mxu0 %v291
    %786 = vmatpush1.msra.mxu0 %v290
    %787 = vmatprep.subr.mxu0 %v293
    %788 = vmatpush1.msra.mxu0 %v292
    %789 = vmatprep.subr.mxu0 %v295
    %790 = vmatpush1.msra.mxu0 %v294
    %791 = vmatprep.mubr.f32.mxu0 %v717
    %792 = vmatmul.mubr.f32.gmra.mrb[0].mxu0 %v716
    %v793 = vpop.f32.mrb[0].mxu0
    %v794 = vadd.f32 0.0, %v793
    %v795 = vpop.f32.mrb[0].mxu0
    %v796 = vadd.f32 0.0, %v795
    %797 = vdwg.mxu0
    %v798 = vadd.f32 %v725, %v794
    %v799 = vadd.f32 %v726, %v796
    %v800 = vtanh.pop %v798
    %v801 = vtanh.pop %v799
    %s802 = smul.addr %s722, 8
    %s803 = scalar_lea.vmem [#allocation3], %s802
    %804 = vst [vmem:[%s803] sm:$0xff] %v800
    %805 = vst [vmem:[%s719 + $0x8] sm:$0xff] %v801
    %s806 = smul.u32 7, 2
    %s807 = smul.addr %s806, 8
    %s808 = scalar_lea.vmem [#allocation2], %s807
    %v809 = vld [vmem:[%s808] sm:$0xff]
    %v810 = vld [vmem:[%s808 + $0x8] sm:$0xff]
    %811 = vmatprep.subr.mxu0 %v233
    %812 = vmatpush1.msra.mxu0 %v232
    %813 = vmatprep.subr.mxu0 %v235
    %814 = vmatpush1.msra.mxu0 %v234
    %815 = vmatprep.subr.mxu0 %v237
    %816 = vmatpush1.msra.mxu0 %v236
    %817 = vmatprep.subr.mxu0 %v239
    %818 = vmatpush1.msra.mxu0 %v238
    %819 = vmatprep.subr.mxu0 %v241
    %820 = vmatpush1.msra.mxu0 %v240
    %821 = vmatprep.subr.mxu0 %v243
    %822 = vmatpush1.msra.mxu0 %v242
    %823 = vmatprep.subr.mxu0 %v245
    %824 = vmatpush1.msra.mxu0 %v244
    %825 = vmatprep.subr.mxu0 %v247
    %826 = vmatpush1.msra.mxu0 %v246
    %827 = vmatprep.subr.mxu0 %v249
    %828 = vmatpush1.msra.mxu0 %v248
    %829 = vmatprep.subr.mxu0 %v251
    %830 = vmatpush1.msra.mxu0 %v250
    %831 = vmatprep.subr.mxu0 %v253
    %832 = vmatpush1.msra.mxu0 %v252
    %833 = vmatprep.subr.mxu0 %v255
    %834 = vmatpush1.msra.mxu0 %v254
    %835 = vmatprep.subr.mxu0 %v257
    %836 = vmatpush1.msra.mxu0 %v256
    %837 = vmatprep.subr.mxu0 %v259
    %838 = vmatpush1.msra.mxu0 %v258
    %839 = vmatprep.subr.mxu0 %v261
    %840 = vmatpush1.msra.mxu0 %v260
    %841 = vmatprep.subr.mxu0 %v263
    %842 = vmatpush1.msra.mxu0 %v262
    %843 = vmatprep.subr.mxu0 %v265
    %844 = vmatpush1.msra.mxu0 %v264
    %845 = vmatprep.subr.mxu0 %v267
    %846 = vmatpush1.msra.mxu0 %v266
    %847 = vmatprep.subr.mxu0 %v269
    %848 = vmatpush1.msra.mxu0 %v268
    %849 = vmatprep.subr.mxu0 %v271
    %850 = vmatpush1.msra.mxu0 %v270
    %851 = vmatprep.subr.mxu0 %v273
    %852 = vmatpush1.msra.mxu0 %v272
    %853 = vmatprep.subr.mxu0 %v275
    %854 = vmatpush1.msra.mxu0 %v274
    %855 = vmatprep.subr.mxu0 %v277
    %856 = vmatpush1.msra.mxu0 %v276
    %857 = vmatprep.subr.mxu0 %v279
    %858 = vmatpush1.msra.mxu0 %v278
    %859 = vmatprep.subr.mxu0 %v281
    %860 = vmatpush1.msra.mxu0 %v280
    %861 = vmatprep.subr.mxu0 %v283
    %862 = vmatpush1.msra.mxu0 %v282
    %863 = vmatprep.subr.mxu0 %v285
    %864 = vmatpush1.msra.mxu0 %v284
    %865 = vmatprep.subr.mxu0 %v287
    %866 = vmatpush1.msra.mxu0 %v286
    %867 = vmatprep.subr.mxu0 %v289
    %868 = vmatpush1.msra.mxu0 %v288
    %869 = vmatprep.subr.mxu0 %v291
    %870 = vmatpush1.msra.mxu0 %v290
    %871 = vmatprep.subr.mxu0 %v293
    %872 = vmatpush1.msra.mxu0 %v292
    %873 = vmatprep.subr.mxu0 %v295
    %874 = vmatpush1.msra.mxu0 %v294
    %875 = vmatprep.mubr.f32.mxu0 %v801
    %876 = vmatmul.mubr.f32.gmra.mrb[0].mxu0 %v800
    %v877 = vpop.f32.mrb[0].mxu0
    %v878 = vadd.f32 0.0, %v877
    %v879 = vpop.f32.mrb[0].mxu0
    %v880 = vadd.f32 0.0, %v879
    %881 = vdwg.mxu0
    %v882 = vadd.f32 %v809, %v878
    %v883 = vadd.f32 %v810, %v880
    %v884 = vtanh.pop %v882
    %v885 = vtanh.pop %v883
    %s886 = smul.addr %s806, 8
    %s887 = scalar_lea.vmem [#allocation3], %s886
    %888 = vst [vmem:[%s887] sm:$0xff] %v884
    %889 = vst [vmem:[%s803 + $0x8] sm:$0xff] %v885
    %890 = vmatprep.subr.mxu0 %v233
    %891 = vmatpush1.msra.mxu0 %v232
    %892 = vmatprep.subr.mxu0 %v235
    %893 = vmatpush1.msra.mxu0 %v234
    %894 = vmatprep.subr.mxu0 %v237
    %895 = vmatpush1.msra.mxu0 %v236
    %896 = vmatprep.subr.mxu0 %v239
    %897 = vmatpush1.msra.mxu0 %v238
    %898 = vmatprep.subr.mxu0 %v241
    %899 = vmatpush1.msra.mxu0 %v240
    %900 = vmatprep.subr.mxu0 %v243
    %901 = vmatpush1.msra.mxu0 %v242
    %902 = vmatprep.subr.mxu0 %v245
    %903 = vmatpush1.msra.mxu0 %v244
    %904 = vmatprep.subr.mxu0 %v247
    %905 = vmatpush1.msra.mxu0 %v246
    %906 = vmatprep.subr.mxu0 %v249
    %907 = vmatpush1.msra.mxu0 %v248
    %908 = vmatprep.subr.mxu0 %v251
    %909 = vmatpush1.msra.mxu0 %v250
    %910 = vmatprep.subr.mxu0 %v253
    %911 = vmatpush1.msra.mxu0 %v252
    %912 = vmatprep.subr.mxu0 %v255
    %913 = vmatpush1.msra.mxu0 %v254
    %914 = vmatprep.subr.mxu0 %v257
    %915 = vmatpush1.msra.mxu0 %v256
    %916 = vmatprep.subr.mxu0 %v259
    %917 = vmatpush1.msra.mxu0 %v258
    %918 = vmatprep.subr.mxu0 %v261
    %919 = vmatpush1.msra.mxu0 %v260
    %920 = vmatprep.subr.mxu0 %v263
    %921 = vmatpush1.msra.mxu0 %v262
    %922 = vmatprep.subr.mxu0 %v265
    %923 = vmatpush1.msra.mxu0 %v264
    %924 = vmatprep.subr.mxu0 %v267
    %925 = vmatpush1.msra.mxu0 %v266
    %926 = vmatprep.subr.mxu0 %v269
    %927 = vmatpush1.msra.mxu0 %v268
    %928 = vmatprep.subr.mxu0 %v271
    %929 = vmatpush1.msra.mxu0 %v270
    %930 = vmatprep.subr.mxu0 %v273
    %931 = vmatpush1.msra.mxu0 %v272
    %932 = vmatprep.subr.mxu0 %v275
    %933 = vmatpush1.msra.mxu0 %v274
    %934 = vmatprep.subr.mxu0 %v277
    %935 = vmatpush1.msra.mxu0 %v276
    %936 = vmatprep.subr.mxu0 %v279
    %937 = vmatpush1.msra.mxu0 %v278
    %938 = vmatprep.subr.mxu0 %v281
    %939 = vmatpush1.msra.mxu0 %v280
    %940 = vmatprep.subr.mxu0 %v283
    %941 = vmatpush1.msra.mxu0 %v282
    %942 = vmatprep.subr.mxu0 %v285
    %943 = vmatpush1.msra.mxu0 %v284
    %944 = vmatprep.subr.mxu0 %v287
    %945 = vmatpush1.msra.mxu0 %v286
    %946 = vmatprep.subr.mxu0 %v289
    %947 = vmatpush1.msra.mxu0 %v288
    %948 = vmatprep.subr.mxu0 %v291
    %949 = vmatpush1.msra.mxu0 %v290
    %950 = vmatprep.subr.mxu0 %v293
    %951 = vmatpush1.msra.mxu0 %v292
    %952 = vmatprep.subr.mxu0 %v295
    %953 = vmatpush1.msra.mxu0 %v294
    %954 = vmatprep.mubr.f32.mxu0 %v885
    %955 = vmatmul.mubr.f32.gmra.mrb[0].mxu0 %v884
    %v956 = vpop.f32.mrb[0].mxu0
    %v957 = vpop.f32.mrb[0].mxu0
    %v958 = vadd.f32 0.0, %v957
    %959 = vdwg.mxu0
    %v960 = vld [vmem:[%s2 + $0x1] sm:$0x1]
    %v962 = vlaneseq
    %v963 = vshrl.u32 %v962, 7
    %v964 = vsub.s32 0, %v963
    %v965 = vrot.slane %v960, %v964
    %v967 = vadd.f32 %v965, %v958
    %v968 = vtanh.pop %v967
    %969 = vst [vmem:[#allocation3 + $0x78] sm:$0xff] %v968
    %v970 = vld [vmem:[#allocation3] sm:$0xff]
    %v971 = vld [vmem:[#allocation3 + $0x8] sm:$0xff]
    %v972 = vld [vmem:[#allocation3 + $0x10] sm:$0xff]
    %v973 = vld [vmem:[#allocation3 + $0x18] sm:$0xff]
    %v974 = vld [vmem:[#allocation3 + $0x20] sm:$0xff]
    %v975 = vld [vmem:[#allocation3 + $0x28] sm:$0xff]
    %v976 = vld [vmem:[#allocation3 + $0x30] sm:$0xff]
    %v977 = vld [vmem:[#allocation3 + $0x38] sm:$0xff]
    %v978 = vld [vmem:[#allocation3 + $0x40] sm:$0xff]
    %v979 = vld [vmem:[#allocation3 + $0x48] sm:$0xff]
    %v980 = vld [vmem:[#allocation3 + $0x50] sm:$0xff]
    %v981 = vld [vmem:[#allocation3 + $0x58] sm:$0xff]
    %v982 = vld [vmem:[#allocation3 + $0x60] sm:$0xff]
    %v983 = vld [vmem:[#allocation3 + $0x68] sm:$0xff]
    %v984 = vld [vmem:[#allocation3 + $0x70] sm:$0xff]
    %v985 = vld [vmem:[#allocation3 + $0x78] sm:$0xff]
    %v986 = vld [vmem:[#allocation7] sm:$0xff]
    %v987 = vld [vmem:[#allocation7 + $0x8] sm:$0xff]
    %v988 = vld [vmem:[#allocation7 + $0x10] sm:$0xff]
    %v989 = vld [vmem:[#allocation7 + $0x18] sm:$0xff]
    %v990 = vld [vmem:[#allocation7 + $0x20] sm:$0xff]
    %v991 = vld [vmem:[#allocation7 + $0x28] sm:$0xff]
    %v992 = vld [vmem:[#allocation7 + $0x30] sm:$0xff]
    %v993 = vld [vmem:[#allocation7 + $0x38] sm:$0xff]
    %v994 = vld [vmem:[#allocation7 + $0x40] sm:$0xff]
    %v995 = vld [vmem:[#allocation7 + $0x48] sm:$0xff]
    %v996 = vld [vmem:[#allocation7 + $0x50] sm:$0xff]
    %v997 = vld [vmem:[#allocation7 + $0x58] sm:$0xff]
    %v998 = vld [vmem:[#allocation7 + $0x60] sm:$0xff]
    %v999 = vld [vmem:[#allocation7 + $0x68] sm:$0xff]
    %v1000 = vld [vmem:[#allocation7 + $0x70] sm:$0xff]
    %v1001 = vld [vmem:[#allocation7 + $0x78] sm:$0xff]
    %v1002 = vld [vmem:[#allocation7 + $0x80] sm:$0xff]
    %v1003 = vld [vmem:[#allocation7 + $0x88] sm:$0xff]
    %v1004 = vld [vmem:[#allocation7 + $0x90] sm:$0xff]
    %v1005 = vld [vmem:[#allocation7 + $0x98] sm:$0xff]
    %v1006 = vld [vmem:[#allocation7 + $0xa0] sm:$0xff]
    %v1007 = vld [vmem:[#allocation7 + $0xa8] sm:$0xff]
    %v1008 = vld [vmem:[#allocation7 + $0xb0] sm:$0xff]
    %v1009 = vld [vmem:[#allocation7 + $0xb8] sm:$0xff]
    %v1010 = vld [vmem:[#allocation7 + $0xc0] sm:$0xff]
    %v1011 = vld [vmem:[#allocation7 + $0xc8] sm:$0xff]
    %v1012 = vld [vmem:[#allocation7 + $0xd0] sm:$0xff]
    %v1013 = vld [vmem:[#allocation7 + $0xd8] sm:$0xff]
    %v1014 = vld [vmem:[#allocation7 + $0xe0] sm:$0xff]
    %v1015 = vld [vmem:[#allocation7 + $0xe8] sm:$0xff]
    %v1016 = vld [vmem:[#allocation7 + $0xf0] sm:$0xff]
    %v1017 = vld [vmem:[#allocation7 + $0xf8] sm:$0xff]
    %v1018 = vld [vmem:[%s5] sm:$0x1]
    %v1020 = vlaneseq
    %v1021 = vshrl.u32 %v1020, 7
    %v1022 = vsub.s32 0, %v1021
    %v1023 = vrot.slane %v1018, %v1022
    %1025 = vmatprep.subr.mxu0 0.0
    %1026 = vmatpush1.msra.mxu0 %v986
    %1027 = vmatprep.subr.mxu0 0.0
    %1028 = vmatpush1.msra.mxu0 %v987
    %1029 = vmatprep.subr.mxu0 0.0
    %1030 = vmatpush1.msra.mxu0 %v988
    %1031 = vmatprep.subr.mxu0 0.0
    %1032 = vmatpush1.msra.mxu0 %v989
    %1033 = vmatprep.subr.mxu0 0.0
    %1034 = vmatpush1.msra.mxu0 %v990
    %1035 = vmatprep.subr.mxu0 0.0
    %1036 = vmatpush1.msra.mxu0 %v991
    %1037 = vmatprep.subr.mxu0 0.0
    %1038 = vmatpush1.msra.mxu0 %v992
    %1039 = vmatprep.subr.mxu0 0.0
    %1040 = vmatpush1.msra.mxu0 %v993
    %1041 = vmatprep.subr.mxu0 0.0
    %1042 = vmatpush1.msra.mxu0 %v994
    %1043 = vmatprep.subr.mxu0 0.0
    %1044 = vmatpush1.msra.mxu0 %v995
    %1045 = vmatprep.subr.mxu0 0.0
    %1046 = vmatpush1.msra.mxu0 %v996
    %1047 = vmatprep.subr.mxu0 0.0
    %1048 = vmatpush1.msra.mxu0 %v997
    %1049 = vmatprep.subr.mxu0 0.0
    %1050 = vmatpush1.msra.mxu0 %v998
    %1051 = vmatprep.subr.mxu0 0.0
    %1052 = vmatpush1.msra.mxu0 %v999
    %1053 = vmatprep.subr.mxu0 0.0
    %1054 = vmatpush1.msra.mxu0 %v1000
    %1055 = vmatprep.subr.mxu0 0.0
    %1056 = vmatpush1.msra.mxu0 %v1001
    %1057 = vmatprep.subr.mxu0 0.0
    %1058 = vmatpush1.msra.mxu0 %v1002
    %1059 = vmatprep.subr.mxu0 0.0
    %1060 = vmatpush1.msra.mxu0 %v1003
    %1061 = vmatprep.subr.mxu0 0.0
    %1062 = vmatpush1.msra.mxu0 %v1004
    %1063 = vmatprep.subr.mxu0 0.0
    %1064 = vmatpush1.msra.mxu0 %v1005
    %1065 = vmatprep.subr.mxu0 0.0
    %1066 = vmatpush1.msra.mxu0 %v1006
    %1067 = vmatprep.subr.mxu0 0.0
    %1068 = vmatpush1.msra.mxu0 %v1007
    %1069 = vmatprep.subr.mxu0 0.0
    %1070 = vmatpush1.msra.mxu0 %v1008
    %1071 = vmatprep.subr.mxu0 0.0
    %1072 = vmatpush1.msra.mxu0 %v1009
    %1073 = vmatprep.subr.mxu0 0.0
    %1074 = vmatpush1.msra.mxu0 %v1010
    %1075 = vmatprep.subr.mxu0 0.0
    %1076 = vmatpush1.msra.mxu0 %v1011
    %1077 = vmatprep.subr.mxu0 0.0
    %1078 = vmatpush1.msra.mxu0 %v1012
    %1079 = vmatprep.subr.mxu0 0.0
    %1080 = vmatpush1.msra.mxu0 %v1013
    %1081 = vmatprep.subr.mxu0 0.0
    %1082 = vmatpush1.msra.mxu0 %v1014
    %1083 = vmatprep.subr.mxu0 0.0
    %1084 = vmatpush1.msra.mxu0 %v1015
    %1085 = vmatprep.subr.mxu0 0.0
    %1086 = vmatpush1.msra.mxu0 %v1016
    %1087 = vmatprep.subr.mxu0 0.0
    %1088 = vmatpush1.msra.mxu0 %v1017
    %1089 = vmatprep.mubr.f32.mxu0 %v971
    %1090 = vmatmul.mubr.f32.gmra.mrb[0].mxu0 %v970
    %v1091 = vpop.f32.mrb[0].mxu0
    %v1092 = vadd.f32 %v1023, %v1091
    %v1093 = vpop.f32.mrb[0].mxu0
    %1094 = vmatprep.mubr.f32.mxu0 %v973
    %1095 = vmatmul.mubr.f32.gmra.mrb[0].mxu0 %v972
    %v1096 = vpop.f32.mrb[0].mxu0
    %v1097 = vadd.f32 %v1023, %v1096
    %v1098 = vpop.f32.mrb[0].mxu0
    %1099 = vmatprep.mubr.f32.mxu0 %v975
    %1100 = vmatmul.mubr.f32.gmra.mrb[0].mxu0 %v974
    %v1101 = vpop.f32.mrb[0].mxu0
    %v1102 = vadd.f32 %v1023, %v1101
    %v1103 = vpop.f32.mrb[0].mxu0
    %1104 = vmatprep.mubr.f32.mxu0 %v977
    %1105 = vmatmul.mubr.f32.gmra.mrb[0].mxu0 %v976
    %v1106 = vpop.f32.mrb[0].mxu0
    %v1107 = vadd.f32 %v1023, %v1106
    %v1108 = vpop.f32.mrb[0].mxu0
    %1109 = vmatprep.mubr.f32.mxu0 %v979
    %1110 = vmatmul.mubr.f32.gmra.mrb[0].mxu0 %v978
    %v1111 = vpop.f32.mrb[0].mxu0
    %v1112 = vadd.f32 %v1023, %v1111
    %v1113 = vpop.f32.mrb[0].mxu0
    %1114 = vmatprep.mubr.f32.mxu0 %v981
    %1115 = vmatmul.mubr.f32.gmra.mrb[0].mxu0 %v980
    %v1116 = vpop.f32.mrb[0].mxu0
    %v1117 = vadd.f32 %v1023, %v1116
    %v1118 = vpop.f32.mrb[0].mxu0
    %1119 = vmatprep.mubr.f32.mxu0 %v983
    %1120 = vmatmul.mubr.f32.gmra.mrb[0].mxu0 %v982
    %v1121 = vpop.f32.mrb[0].mxu0
    %v1122 = vadd.f32 %v1023, %v1121
    %v1123 = vpop.f32.mrb[0].mxu0
    %1124 = vmatprep.mubr.f32.mxu0 %v985
    %1125 = vmatmul.mubr.f32.gmra.mrb[0].mxu0 %v984
    %v1126 = vpop.f32.mrb[0].mxu0
    %v1127 = vadd.f32 %v1023, %v1126
    %v1128 = vpop.f32.mrb[0].mxu0
    %1129 = vdwg.mxu0
    %1130 = vst [vmem:[#allocation9] sm:$0xff] %v1092
    %1131 = vst [vmem:[#allocation9 + $0x8] sm:$0xff] %v1097
    %1132 = vst [vmem:[#allocation9 + $0x10] sm:$0xff] %v1102
    %1133 = vst [vmem:[#allocation9 + $0x18] sm:$0xff] %v1107
    %1134 = vst [vmem:[#allocation9 + $0x20] sm:$0xff] %v1112
    %1135 = vst [vmem:[#allocation9 + $0x28] sm:$0xff] %v1117
    %1136 = vst [vmem:[#allocation9 + $0x30] sm:$0xff] %v1122
    %1137 = vst [vmem:[#allocation9 + $0x38] sm:$0xff] %v1127
    // Predicated region
    $region34: #{tpu_custom_call.1} parent=1 // pred_check
      _
    $region35: #{tpu_custom_call.1} parent=1 // pred_check_branch
      %1139 = sbr.rel (0) target = $region37
    $region36: #{tpu_custom_call.1} parent=1 // pred_region
      %s1141 = ssub.s32 1024, 1024
      %1142 = vsyncadd [#allocation6], %s1141
      %s1143 = sshll.u32 [#allocation9], 4
      %s1144 = int_to_ptr.vmem [resolvable:$true] %s1143
      %1149 = dma.vmem_to_hbm [thread:$0]  %s1144, 1024, %s6, [#allocation6], 128, 128, 8
    $region37: #{tpu_custom_call.1} parent=1 // pred_fallthru
      _
    // Predicated region
    $region38: #{tpu_custom_call.1} parent=1 // pred_check
      _
    $region39: #{tpu_custom_call.1} parent=1 // pred_check_branch
      %1151 = sbr.rel (0) target = $region41
    $region40: #{tpu_custom_call.1} parent=1 // pred_region
      %1152 = dma.done [#allocation6], 1024
    $region41: #{tpu_custom_call.1} parent=1 // pred_fallthru
      _
    %1153 = vsyncpa [#allocation5], 1
    %1154 = vsyncpa [#allocation8], 1
    %1155 = vsyncpa [#allocation6], 1

</llo_original>
